<compile_context>
chip_gen: v5e
topology: v5e:2x2
jax: 0.10.0
libtpu: 0.0.40
codegen_flags: <defaults>
</compile_context>

<pallas_src>
import functools

import jax
import jax.numpy as jnp
import numpy as np
from jax.experimental import pallas as pl
from jax.experimental.pallas import tpu as pltpu


# --------------------------------------------------------------------------
# Fused forward kernel: B images per grid step, everything VMEM-resident.
# --------------------------------------------------------------------------
def _fused_forward_kernel(x_ref, w1_ref, b1_ref, w2_ref, b2_ref,
                          d1w_ref, d1b_ref, d2w_ref, d2b_ref, o_ref,
                          *, B, H, W, k1p, c1, c2, cout):
    f32 = jnp.float32
    HW = H * W
    H2, W2 = H // 2, W // 2
    H4, W4 = H2 // 2, W2 // 2

    # ---------------- conv1 (im2col done in wrapper) + ReLU -----------------
    lhs = x_ref[...].reshape(B * HW, k1p)                    # (B*H*W, 32)
    a = jnp.dot(lhs, w1_ref[...], preferred_element_type=f32)
    a = jnp.maximum(a + b1_ref[...], 0.0)                    # (B*H*W, c1)

    # ---------------- maxpool 2x2 -------------------------------------------
    a = a.reshape(B * H2, 2, W, c1)
    a = jnp.maximum(a[:, 0], a[:, 1])                        # (B*H2, W, c1)
    a = a.reshape(B * H2, W2, 2, c1)
    p1 = jnp.maximum(a[:, :, 0, :], a[:, :, 1, :])           # (B*H2, W2, c1)
    p1 = p1.reshape(B, H2, W2, c1)

    # ---------------- conv2 (3x3, pad 1) + ReLU -----------------------------
    # 9 accumulated K=c1 matmuls fed by zero-filled shifted views; no padded
    # scratch, no lane concat, no full-buffer zeroing.
    acc = jnp.zeros((B * H2 * W2, c2), f32)
    zrow = jnp.zeros((B, 1, W2, c1), f32)
    zcol = jnp.zeros((B, H2, 1, c1), f32)
    for dy in range(3):
        sy = dy - 1
        if sy == -1:
            xr = jnp.concatenate([zrow, p1[:, :H2 - 1]], axis=1)
        elif sy == 1:
            xr = jnp.concatenate([p1[:, 1:], zrow], axis=1)
        else:
            xr = p1
        for dx in range(3):
            sx = dx - 1
            if sx == -1:
                xc = jnp.concatenate([zcol, xr[:, :, :W2 - 1]], axis=2)
            elif sx == 1:
                xc = jnp.concatenate([xr[:, :, 1:], zcol], axis=2)
            else:
                xc = xr
            acc = acc + jnp.dot(xc.reshape(B * H2 * W2, c1),
                                w2_ref[dy * 3 + dx],
                                preferred_element_type=f32)
    a2 = jnp.maximum(acc + b2_ref[...], 0.0)                  # (B*H2*W2, c2)

    # ---------------- maxpool 2x2 -------------------------------------------
    a2 = a2.reshape(B * H4, 2, W2, c2)
    a2 = jnp.maximum(a2[:, 0], a2[:, 1])                      # (B*H4, W2, c2)
    a2 = a2.reshape(B * H4, W4, 2, c2)
    p2 = jnp.maximum(a2[:, :, 0, :], a2[:, :, 1, :])          # (B*H4, W4, c2)
    x3 = p2.reshape(B * H4 * W4, c2)

    # ---------------- deconv1 (2x2, stride 2) + ReLU ------------------------
    # columns packed (dy, dx, co); output kept blocked (no interleave).
    y1 = jnp.dot(x3, d1w_ref[...], preferred_element_type=f32) + d1b_ref[...]
    y1 = jnp.maximum(y1, 0.0)                                 # (B*H4*W4, 4*c1)

    # ---------------- deconv2 (2x2, stride 2) -------------------------------
    # block-diagonal weight: output columns packed (dy, dx, ey, ex, co);
    # spatial un-blocking is done by a tiny transpose in the wrapper.
    y2 = jnp.dot(y1, d2w_ref[...], preferred_element_type=f32) + d2b_ref[...]
    o_ref[...] = y2.reshape(B, H4 * W4, 16 * cout)


# --------------------------------------------------------------------------
# Parameters: raw (PyTorch-like layouts) + one-time repack for the kernel.
# --------------------------------------------------------------------------
def init_params(key, in_channels=3, out_channels=2):
    ks = jax.random.split(key, 8)

    def w(k, shape, scale):
        return (scale * jax.random.normal(k, shape)).astype(jnp.float32)

    return {
        # conv weights stored as (kh, kw, Cin, Cout) (HWIO)
        "c1_w": w(ks[0], (3, 3, in_channels, 32), 0.2),
        "c1_b": w(ks[1], (32,), 0.1),
        "c2_w": w(ks[2], (3, 3, 32, 64), 0.05),
        "c2_b": w(ks[3], (64,), 0.1),
        # deconv weights stored in PyTorch layout (Cin, Cout, kh, kw)
        "d1_w": w(ks[4], (64, 32, 2, 2), 0.05),
        "d1_b": w(ks[5], (32,), 0.1),
        "d2_w": w(ks[6], (32, out_channels, 2, 2), 0.1),
        "d2_b": w(ks[7], (2,), 0.1) if out_channels == 2 else w(ks[7], (out_channels,), 0.1),
    }


def prepare_params(params):
    """One-time weight repack (hoisted out of the forward path)."""
    c1_w, c2_w = params["c1_w"], params["c2_w"]
    d1_w, d2_w = params["d1_w"], params["d2_w"]
    cin1, c1 = c1_w.shape[2], c1_w.shape[3]
    cin2, c2 = c2_w.shape[2], c2_w.shape[3]
    cout = d2_w.shape[1]

    # conv1 im2col weight, rows ordered (dy, dx, cin), K zero-padded to x8.
    k1 = 9 * cin1
    k1p = int(-(-k1 // 8)) * 8
    w1 = c1_w.reshape(k1, c1).astype(jnp.float32)
    if k1p > k1:
        w1 = jnp.pad(w1, ((0, k1p - k1), (0, 0)))

    # conv2 weights as (9, cin2, c2), leading dim ordered (dy, dx).
    w2 = c2_w.reshape(9, cin2, c2).astype(jnp.float32)

    # deconv1: (c2, 4*c1), columns ordered (dy, dx, co).
    d1w = jnp.transpose(d1_w, (0, 2, 3, 1)).reshape(c2, 4 * c1).astype(jnp.float32)
    d1b = jnp.tile(params["d1_b"], 4).reshape(1, 4 * c1).astype(jnp.float32)

    # deconv2: block-diagonal (4*c1, 16*cout) so the kernel needs no lane
    # slicing and no spatial interleave; columns ordered (dy, dx, ey, ex, co).
    d2p = jnp.transpose(d2_w, (0, 2, 3, 1)).reshape(c1, 4 * cout).astype(jnp.float32)
    rows = []
    for k in range(4):
        blocks = [jnp.zeros((c1, 4 * cout), jnp.float32)] * 4
        blocks[k] = d2p
        rows.append(jnp.concatenate(blocks, axis=1))
    d2w_block = jnp.concatenate(rows, axis=0)                 # (4*c1, 16*cout)
    d2b_block = jnp.tile(params["d2_b"], 16).reshape(1, 16 * cout).astype(jnp.float32)

    return {"w1": w1, "b1": params["c1_b"].reshape(1, c1).astype(jnp.float32),
            "w2": w2, "b2": params["c2_b"].reshape(1, c2).astype(jnp.float32),
            "d1w": d1w, "d1b": d1b, "d2w": d2w_block, "d2b": d2b_block}


def _pick_block_batch(n, H, W, k1p):
    """Images per grid step: as large as useful, but keep >= 2 grid steps
    (v7x has 2 TensorCores) and a conservative VMEM budget."""
    per_image = H * W * (k1p + 96) * 4 * 3      # rough live-value estimate
    cap = max(1, min(8, (8 << 20) // max(per_image, 1)))
    best = 1
    for b in range(1, min(cap, n) + 1):
        if n % b == 0 and (n // b >= 2 or n == 1):
            best = b
    return best


# --------------------------------------------------------------------------
# Public forward pass (NCHW in, NCHW out), one fused pallas_call.
# --------------------------------------------------------------------------
@jax.jit
def student_unet_forward(prepared, x_nchw):
    N, Cin, H, W = x_nchw.shape
    assert H % 4 == 0 and W % 4 == 0, "spatial dims must be divisible by 4"
    k1p, c1 = prepared["w1"].shape
    c2 = prepared["b2"].shape[1]
    cout = prepared["d2b"].shape[1] // 16
    H4, W4 = H // 4, W // 4
    k1 = 9 * Cin

    # --- conv1 im2col on the wrapper side (tiny HBM cost, kills the padded
    #     scratch + masked scatter + 9-way 3-lane concat inside the kernel).
    x = jnp.transpose(x_nchw, (0, 2, 3, 1)).astype(jnp.float32)     # NHWC
    xp = jnp.pad(x, ((0, 0), (1, 1), (1, 1), (0, 0)))
    taps = [xp[:, dy:dy + H, dx:dx + W, :] for dy in range(3) for dx in range(3)]
    im2col = jnp.concatenate(taps, axis=-1)                         # (N,H,W,9*Cin)
    if k1p > k1:
        im2col = jnp.pad(im2col, ((0, 0), (0, 0), (0, 0), (0, k1p - k1)))
    im2col = im2col.reshape(N, H * W, k1p)

    B = _pick_block_batch(N, H, W, k1p)
    kern = functools.partial(_fused_forward_kernel, B=B, H=H, W=W,
                             k1p=k1p, c1=c1, c2=c2, cout=cout)

    out_blocked = pl.pallas_call(
        kern,
        out_shape=jax.ShapeDtypeStruct((N, H4 * W4, 16 * cout), jnp.float32),
        grid=(N // B,),
        in_specs=[
            pl.BlockSpec((B, H * W, k1p), lambda n: (n, 0, 0)),
            pl.BlockSpec((k1p, c1), lambda n: (0, 0)),
            pl.BlockSpec((1, c1), lambda n: (0, 0)),
            pl.BlockSpec((9, c1, c2), lambda n: (0, 0, 0)),
            pl.BlockSpec((1, c2), lambda n: (0, 0)),
            pl.BlockSpec((c2, 4 * c1), lambda n: (0, 0)),
            pl.BlockSpec((1, 4 * c1), lambda n: (0, 0)),
            pl.BlockSpec((4 * c1, 16 * cout), lambda n: (0, 0)),
            pl.BlockSpec((1, 16 * cout), lambda n: (0, 0)),
        ],
        out_specs=pl.BlockSpec((B, H4 * W4, 16 * cout), lambda n: (n, 0, 0)),
        compiler_params=pltpu.CompilerParams(
            dimension_semantics=("parallel",),
            vmem_limit_bytes=48 * 1024 * 1024),
    )(im2col, prepared["w1"], prepared["b1"], prepared["w2"], prepared["b2"],
      prepared["d1w"], prepared["d1b"], prepared["d2w"], prepared["d2b"])

    # Un-block on the tiny output: rows are (p, q); lanes are (dy, dx, ey, ex, co).
    # Output pixel = (4p + 2dy + ey, 4q + 2dx + ex).
    t = out_blocked.reshape(N, H4, W4, 2, 2, 2, 2, cout)
    t = jnp.transpose(t, (0, 7, 1, 3, 5, 2, 4, 6))
    return t.reshape(N, cout, H, W)


# --------------------------------------------------------------------------
# Pure-JAX reference (same math, no Pallas) for a correctness check.
# --------------------------------------------------------------------------
def _ref_conv3x3(x, w, b, relu):
    N, H, W, _ = x.shape
    Cout = w.shape[-1]
    xp = jnp.pad(x, ((0, 0), (1, 1), (1, 1), (0, 0)))
    out = jnp.zeros((N, H, W, Cout), jnp.float32)
    for dy in range(3):
        for dx in range(3):
            out = out + jnp.einsum("nhwc,cd->nhwd",
                                   xp[:, dy:dy + H, dx:dx + W, :], w[dy, dx],
                                   precision=jax.lax.Precision.HIGHEST)
    out = out + b
    return jnp.maximum(out, 0.0) if relu else out


def _ref_maxpool2(x):
    N, H, W, C = x.shape
    return x.reshape(N, H // 2, 2, W // 2, 2, C).max(axis=(2, 4))


def _ref_deconv(x, w, b, relu):
    N, H, W, _ = x.shape
    Cout = w.shape[1]
    wt = jnp.transpose(w, (0, 2, 3, 1))  # (Cin, 2, 2, Cout)
    y = jnp.einsum("nijc,cxyd->nixjyd", x, wt,
                   precision=jax.lax.Precision.HIGHEST)
    y = y.reshape(N, 2 * H, 2 * W, Cout) + b
    return jnp.maximum(y, 0.0) if relu else y


def reference_forward(params, x_nchw):
    x = jnp.transpose(x_nchw, (0, 2, 3, 1)).astype(jnp.float32)
    x = _ref_maxpool2(_ref_conv3x3(x, params["c1_w"], params["c1_b"], True))
    x = _ref_maxpool2(_ref_conv3x3(x, params["c2_w"], params["c2_b"], True))
    x = _ref_deconv(x, params["d1_w"], params["d1_b"], True)
    x = _ref_deconv(x, params["d2_w"], params["d2_b"], False)
    return jnp.transpose(x, (0, 3, 1, 2))


if __name__ == "__main__":
    key = jax.random.PRNGKey(0)
    pkey, xkey, xkey2 = jax.random.split(key, 3)
    params = init_params(pkey, in_channels=3, out_channels=2)
    prepared = prepare_params(params)   # weight repack hoisted out of forward

    # NCHW input, matching the PyTorch module's convention.
    x = jax.random.normal(xkey, (2, 3, 16, 16), dtype=jnp.float32)
    out = jax.block_until_ready(student_unet_forward(prepared, x))
    assert out.shape == (2, 2, 16, 16), out.shape
    ref = jax.block_until_ready(reference_forward(params, x))
    err = float(jnp.max(jnp.abs(out - ref)))
    if not np.isfinite(err) or err > 2e-3:
        raise AssertionError(f"Pallas output mismatch vs reference (N=2): {err}")

    # Second check exercising the batched (B>1) grid path.
    x8 = jax.random.normal(xkey2, (8, 3, 16, 16), dtype=jnp.float32)
    out8 = jax.block_until_ready(student_unet_forward(prepared, x8))
    ref8 = jax.block_until_ready(reference_forward(params, x8))
    err8 = float(jnp.max(jnp.abs(out8 - ref8)))
    if not np.isfinite(err8) or err8 > 2e-3:
        raise AssertionError(f"Pallas output mismatch vs reference (N=8): {err8}")

    print("KERNEL_OK")
</pallas_src>

<mosaic_0001>
module attributes {stable_mosaic.version = 11 : i64} {
  func.func @_fused_forward_kernel(%arg0: i32, %arg1: memref<1x256x32xf32, #tpu.memory_space<vmem>>, %arg2: memref<32x32xf32, #tpu.memory_space<vmem>>, %arg3: memref<1x32xf32, #tpu.memory_space<vmem>>, %arg4: memref<9x32x64xf32, #tpu.memory_space<vmem>>, %arg5: memref<1x64xf32, #tpu.memory_space<vmem>>, %arg6: memref<64x128xf32, #tpu.memory_space<vmem>>, %arg7: memref<1x128xf32, #tpu.memory_space<vmem>>, %arg8: memref<128x32xf32, #tpu.memory_space<vmem>>, %arg9: memref<1x32xf32, #tpu.memory_space<vmem>>, %arg10: memref<1x16x32xf32, #tpu.memory_space<vmem>>) attributes {dimension_semantics = [#tpu.dimension_semantics<parallel>], iteration_bounds = array<i64: 2>, scalar_prefetch = 0 : i64, scratch_operands = 0 : i64, tpu.core_type = #tpu.core_type<tc>, window_params = [{transform_indices = @transform_0, window_bounds = array<i64: 1, 256, 32>}, {pipeline_mode = #tpu.pipeline_mode<synchronous>, transform_indices = @transform_1, window_bounds = array<i64: 32, 32>}, {pipeline_mode = #tpu.pipeline_mode<synchronous>, transform_indices = @transform_2, window_bounds = array<i64: 1, 32>}, {pipeline_mode = #tpu.pipeline_mode<synchronous>, transform_indices = @transform_3, window_bounds = array<i64: 9, 32, 64>}, {pipeline_mode = #tpu.pipeline_mode<synchronous>, transform_indices = @transform_4, window_bounds = array<i64: 1, 64>}, {pipeline_mode = #tpu.pipeline_mode<synchronous>, transform_indices = @transform_5, window_bounds = array<i64: 64, 128>}, {pipeline_mode = #tpu.pipeline_mode<synchronous>, transform_indices = @transform_6, window_bounds = array<i64: 1, 128>}, {pipeline_mode = #tpu.pipeline_mode<synchronous>, transform_indices = @transform_7, window_bounds = array<i64: 128, 32>}, {pipeline_mode = #tpu.pipeline_mode<synchronous>, transform_indices = @transform_8, window_bounds = array<i64: 1, 32>}, {transform_indices = @transform_9, window_bounds = array<i64: 1, 16, 32>}]} {
    %c0 = arith.constant 0 : index
    %c0_0 = arith.constant 0 : index
    %c0_1 = arith.constant 0 : index
    %0 = vector.load %arg1[%c0, %c0_0, %c0_1] : memref<1x256x32xf32, #tpu.memory_space<vmem>>, vector<1x256x32xf32>
    %1 = vector.shape_cast %0 : vector<1x256x32xf32> to vector<256x32xf32>
    %c0_2 = arith.constant 0 : index
    %c0_3 = arith.constant 0 : index
    %2 = vector.load %arg2[%c0_2, %c0_3] : memref<32x32xf32, #tpu.memory_space<vmem>>, vector<32x32xf32>
    %cst = arith.constant dense<0.000000e+00> : vector<256x32xf32>
    %3 = tpu.matmul %1, %2, %cst {dimension_numbers = #tpu.dot_dimension_numbers<[1], [0], [0], [1], [0, 0, 1, 1], [], []>} : vector<256x32xf32>, vector<32x32xf32>, vector<256x32xf32> -> vector<256x32xf32>
    %c0_4 = arith.constant 0 : index
    %c0_5 = arith.constant 0 : index
    %4 = vector.load %arg3[%c0_4, %c0_5] : memref<1x32xf32, #tpu.memory_space<vmem>>, vector<1x32xf32>
    %5 = vector.broadcast %4 : vector<1x32xf32> to vector<256x32xf32>
    %6 = arith.addf %3, %5 : vector<256x32xf32>
    %cst_6 = arith.constant 0.000000e+00 : f32
    %7 = vector.broadcast %cst_6 : f32 to vector<256x32xf32>
    %8 = arith.maximumf %6, %7 : vector<256x32xf32>
    %9 = vector.shape_cast %8 : vector<256x32xf32> to vector<8x2x16x32xf32>
    %10 = vector.extract_strided_slice %9 {offsets = [0, 0, 0, 0], sizes = [8, 1, 16, 32], strides = [1, 1, 1, 1]} : vector<8x2x16x32xf32> to vector<8x1x16x32xf32>
    %11 = vector.shape_cast %10 : vector<8x1x16x32xf32> to vector<8x16x32xf32>
    %12 = vector.extract_strided_slice %9 {offsets = [0, 1, 0, 0], sizes = [8, 1, 16, 32], strides = [1, 1, 1, 1]} : vector<8x2x16x32xf32> to vector<8x1x16x32xf32>
    %13 = vector.shape_cast %12 : vector<8x1x16x32xf32> to vector<8x16x32xf32>
    %14 = arith.maximumf %11, %13 : vector<8x16x32xf32>
    %15 = vector.shape_cast %14 : vector<8x16x32xf32> to vector<8x8x2x32xf32>
    %16 = vector.extract_strided_slice %15 {offsets = [0, 0, 0, 0], sizes = [8, 8, 1, 32], strides = [1, 1, 1, 1]} : vector<8x8x2x32xf32> to vector<8x8x1x32xf32>
    %17 = vector.shape_cast %16 : vector<8x8x1x32xf32> to vector<8x8x32xf32>
    %18 = vector.extract_strided_slice %15 {offsets = [0, 0, 1, 0], sizes = [8, 8, 1, 32], strides = [1, 1, 1, 1]} : vector<8x8x2x32xf32> to vector<8x8x1x32xf32>
    %19 = vector.shape_cast %18 : vector<8x8x1x32xf32> to vector<8x8x32xf32>
    %20 = arith.maximumf %17, %19 : vector<8x8x32xf32>
    %21 = vector.shape_cast %20 : vector<8x8x32xf32> to vector<1x8x8x32xf32>
    %cst_7 = arith.constant 0.000000e+00 : f32
    %22 = vector.broadcast %cst_7 : f32 to vector<64x64xf32>
    %cst_8 = arith.constant 0.000000e+00 : f32
    %23 = vector.broadcast %cst_8 : f32 to vector<1x1x8x32xf32>
    %cst_9 = arith.constant 0.000000e+00 : f32
    %24 = vector.broadcast %cst_9 : f32 to vector<1x8x1x32xf32>
    %25 = vector.extract_strided_slice %21 {offsets = [0, 0, 0, 0], sizes = [1, 7, 8, 32], strides = [1, 1, 1, 1]} : vector<1x8x8x32xf32> to vector<1x7x8x32xf32>
    %26 = tpu.concatenate %23, %25 in 1 : vector<1x1x8x32xf32>, vector<1x7x8x32xf32> -> vector<1x8x8x32xf32>
    %27 = vector.extract_strided_slice %26 {offsets = [0, 0, 0, 0], sizes = [1, 8, 7, 32], strides = [1, 1, 1, 1]} : vector<1x8x8x32xf32> to vector<1x8x7x32xf32>
    %28 = tpu.concatenate %24, %27 in 2 : vector<1x8x1x32xf32>, vector<1x8x7x32xf32> -> vector<1x8x8x32xf32>
    %29 = vector.shape_cast %28 : vector<1x8x8x32xf32> to vector<64x32xf32>
    %c0_10 = arith.constant 0 : index
    %c0_11 = arith.constant 0 : index
    %c0_12 = arith.constant 0 : index
    %30 = vector.load %arg4[%c0_10, %c0_11, %c0_12] : memref<9x32x64xf32, #tpu.memory_space<vmem>>, vector<1x32x64xf32>
    %31 = vector.shape_cast %30 : vector<1x32x64xf32> to vector<32x64xf32>
    %cst_13 = arith.constant dense<0.000000e+00> : vector<64x64xf32>
    %32 = tpu.matmul %29, %31, %cst_13 {dimension_numbers = #tpu.dot_dimension_numbers<[1], [0], [0], [1], [0, 0, 1, 1], [], []>} : vector<64x32xf32>, vector<32x64xf32>, vector<64x64xf32> -> vector<64x64xf32>
    %33 = arith.addf %22, %32 : vector<64x64xf32>
    %34 = vector.shape_cast %26 : vector<1x8x8x32xf32> to vector<64x32xf32>
    %c1 = arith.constant 1 : index
    %c0_14 = arith.constant 0 : index
    %c0_15 = arith.constant 0 : index
    %35 = vector.load %arg4[%c1, %c0_14, %c0_15] : memref<9x32x64xf32, #tpu.memory_space<vmem>>, vector<1x32x64xf32>
    %36 = vector.shape_cast %35 : vector<1x32x64xf32> to vector<32x64xf32>
    %cst_16 = arith.constant dense<0.000000e+00> : vector<64x64xf32>
    %37 = tpu.matmul %34, %36, %cst_16 {dimension_numbers = #tpu.dot_dimension_numbers<[1], [0], [0], [1], [0, 0, 1, 1], [], []>} : vector<64x32xf32>, vector<32x64xf32>, vector<64x64xf32> -> vector<64x64xf32>
    %38 = arith.addf %33, %37 : vector<64x64xf32>
    %39 = vector.extract_strided_slice %26 {offsets = [0, 0, 1, 0], sizes = [1, 8, 7, 32], strides = [1, 1, 1, 1]} : vector<1x8x8x32xf32> to vector<1x8x7x32xf32>
    %40 = tpu.concatenate %39, %24 in 2 : vector<1x8x7x32xf32>, vector<1x8x1x32xf32> -> vector<1x8x8x32xf32>
    %41 = vector.shape_cast %40 : vector<1x8x8x32xf32> to vector<64x32xf32>
    %c2 = arith.constant 2 : index
    %c0_17 = arith.constant 0 : index
    %c0_18 = arith.constant 0 : index
    %42 = vector.load %arg4[%c2, %c0_17, %c0_18] : memref<9x32x64xf32, #tpu.memory_space<vmem>>, vector<1x32x64xf32>
    %43 = vector.shape_cast %42 : vector<1x32x64xf32> to vector<32x64xf32>
    %cst_19 = arith.constant dense<0.000000e+00> : vector<64x64xf32>
    %44 = tpu.matmul %41, %43, %cst_19 {dimension_numbers = #tpu.dot_dimension_numbers<[1], [0], [0], [1], [0, 0, 1, 1], [], []>} : vector<64x32xf32>, vector<32x64xf32>, vector<64x64xf32> -> vector<64x64xf32>
    %45 = arith.addf %38, %44 : vector<64x64xf32>
    %46 = vector.extract_strided_slice %21 {offsets = [0, 0, 0, 0], sizes = [1, 8, 7, 32], strides = [1, 1, 1, 1]} : vector<1x8x8x32xf32> to vector<1x8x7x32xf32>
    %47 = tpu.concatenate %24, %46 in 2 : vector<1x8x1x32xf32>, vector<1x8x7x32xf32> -> vector<1x8x8x32xf32>
    %48 = vector.shape_cast %47 : vector<1x8x8x32xf32> to vector<64x32xf32>
    %c3 = arith.constant 3 : index
    %c0_20 = arith.constant 0 : index
    %c0_21 = arith.constant 0 : index
    %49 = vector.load %arg4[%c3, %c0_20, %c0_21] : memref<9x32x64xf32, #tpu.memory_space<vmem>>, vector<1x32x64xf32>
    %50 = vector.shape_cast %49 : vector<1x32x64xf32> to vector<32x64xf32>
    %cst_22 = arith.constant dense<0.000000e+00> : vector<64x64xf32>
    %51 = tpu.matmul %48, %50, %cst_22 {dimension_numbers = #tpu.dot_dimension_numbers<[1], [0], [0], [1], [0, 0, 1, 1], [], []>} : vector<64x32xf32>, vector<32x64xf32>, vector<64x64xf32> -> vector<64x64xf32>
    %52 = arith.addf %45, %51 : vector<64x64xf32>
    %53 = vector.shape_cast %21 : vector<1x8x8x32xf32> to vector<64x32xf32>
    %c4 = arith.constant 4 : index
    %c0_23 = arith.constant 0 : index
    %c0_24 = arith.constant 0 : index
    %54 = vector.load %arg4[%c4, %c0_23, %c0_24] : memref<9x32x64xf32, #tpu.memory_space<vmem>>, vector<1x32x64xf32>
    %55 = vector.shape_cast %54 : vector<1x32x64xf32> to vector<32x64xf32>
    %cst_25 = arith.constant dense<0.000000e+00> : vector<64x64xf32>
    %56 = tpu.matmul %53, %55, %cst_25 {dimension_numbers = #tpu.dot_dimension_numbers<[1], [0], [0], [1], [0, 0, 1, 1], [], []>} : vector<64x32xf32>, vector<32x64xf32>, vector<64x64xf32> -> vector<64x64xf32>
    %57 = arith.addf %52, %56 : vector<64x64xf32>
    %58 = vector.extract_strided_slice %21 {offsets = [0, 0, 1, 0], sizes = [1, 8, 7, 32], strides = [1, 1, 1, 1]} : vector<1x8x8x32xf32> to vector<1x8x7x32xf32>
    %59 = tpu.concatenate %58, %24 in 2 : vector<1x8x7x32xf32>, vector<1x8x1x32xf32> -> vector<1x8x8x32xf32>
    %60 = vector.shape_cast %59 : vector<1x8x8x32xf32> to vector<64x32xf32>
    %c5 = arith.constant 5 : index
    %c0_26 = arith.constant 0 : index
    %c0_27 = arith.constant 0 : index
    %61 = vector.load %arg4[%c5, %c0_26, %c0_27] : memref<9x32x64xf32, #tpu.memory_space<vmem>>, vector<1x32x64xf32>
    %62 = vector.shape_cast %61 : vector<1x32x64xf32> to vector<32x64xf32>
    %cst_28 = arith.constant dense<0.000000e+00> : vector<64x64xf32>
    %63 = tpu.matmul %60, %62, %cst_28 {dimension_numbers = #tpu.dot_dimension_numbers<[1], [0], [0], [1], [0, 0, 1, 1], [], []>} : vector<64x32xf32>, vector<32x64xf32>, vector<64x64xf32> -> vector<64x64xf32>
    %64 = arith.addf %57, %63 : vector<64x64xf32>
    %65 = vector.extract_strided_slice %21 {offsets = [0, 1, 0, 0], sizes = [1, 7, 8, 32], strides = [1, 1, 1, 1]} : vector<1x8x8x32xf32> to vector<1x7x8x32xf32>
    %66 = tpu.concatenate %65, %23 in 1 : vector<1x7x8x32xf32>, vector<1x1x8x32xf32> -> vector<1x8x8x32xf32>
    %67 = vector.extract_strided_slice %66 {offsets = [0, 0, 0, 0], sizes = [1, 8, 7, 32], strides = [1, 1, 1, 1]} : vector<1x8x8x32xf32> to vector<1x8x7x32xf32>
    %68 = tpu.concatenate %24, %67 in 2 : vector<1x8x1x32xf32>, vector<1x8x7x32xf32> -> vector<1x8x8x32xf32>
    %69 = vector.shape_cast %68 : vector<1x8x8x32xf32> to vector<64x32xf32>
    %c6 = arith.constant 6 : index
    %c0_29 = arith.constant 0 : index
    %c0_30 = arith.constant 0 : index
    %70 = vector.load %arg4[%c6, %c0_29, %c0_30] : memref<9x32x64xf32, #tpu.memory_space<vmem>>, vector<1x32x64xf32>
    %71 = vector.shape_cast %70 : vector<1x32x64xf32> to vector<32x64xf32>
    %cst_31 = arith.constant dense<0.000000e+00> : vector<64x64xf32>
    %72 = tpu.matmul %69, %71, %cst_31 {dimension_numbers = #tpu.dot_dimension_numbers<[1], [0], [0], [1], [0, 0, 1, 1], [], []>} : vector<64x32xf32>, vector<32x64xf32>, vector<64x64xf32> -> vector<64x64xf32>
    %73 = arith.addf %64, %72 : vector<64x64xf32>
    %74 = vector.shape_cast %66 : vector<1x8x8x32xf32> to vector<64x32xf32>
    %c7 = arith.constant 7 : index
    %c0_32 = arith.constant 0 : index
    %c0_33 = arith.constant 0 : index
    %75 = vector.load %arg4[%c7, %c0_32, %c0_33] : memref<9x32x64xf32, #tpu.memory_space<vmem>>, vector<1x32x64xf32>
    %76 = vector.shape_cast %75 : vector<1x32x64xf32> to vector<32x64xf32>
    %cst_34 = arith.constant dense<0.000000e+00> : vector<64x64xf32>
    %77 = tpu.matmul %74, %76, %cst_34 {dimension_numbers = #tpu.dot_dimension_numbers<[1], [0], [0], [1], [0, 0, 1, 1], [], []>} : vector<64x32xf32>, vector<32x64xf32>, vector<64x64xf32> -> vector<64x64xf32>
    %78 = arith.addf %73, %77 : vector<64x64xf32>
    %79 = vector.extract_strided_slice %66 {offsets = [0, 0, 1, 0], sizes = [1, 8, 7, 32], strides = [1, 1, 1, 1]} : vector<1x8x8x32xf32> to vector<1x8x7x32xf32>
    %80 = tpu.concatenate %79, %24 in 2 : vector<1x8x7x32xf32>, vector<1x8x1x32xf32> -> vector<1x8x8x32xf32>
    %81 = vector.shape_cast %80 : vector<1x8x8x32xf32> to vector<64x32xf32>
    %c8 = arith.constant 8 : index
    %c0_35 = arith.constant 0 : index
    %c0_36 = arith.constant 0 : index
    %82 = vector.load %arg4[%c8, %c0_35, %c0_36] : memref<9x32x64xf32, #tpu.memory_space<vmem>>, vector<1x32x64xf32>
    %83 = vector.shape_cast %82 : vector<1x32x64xf32> to vector<32x64xf32>
    %cst_37 = arith.constant dense<0.000000e+00> : vector<64x64xf32>
    %84 = tpu.matmul %81, %83, %cst_37 {dimension_numbers = #tpu.dot_dimension_numbers<[1], [0], [0], [1], [0, 0, 1, 1], [], []>} : vector<64x32xf32>, vector<32x64xf32>, vector<64x64xf32> -> vector<64x64xf32>
    %85 = arith.addf %78, %84 : vector<64x64xf32>
    %c0_38 = arith.constant 0 : index
    %c0_39 = arith.constant 0 : index
    %86 = vector.load %arg5[%c0_38, %c0_39] : memref<1x64xf32, #tpu.memory_space<vmem>>, vector<1x64xf32>
    %87 = vector.broadcast %86 : vector<1x64xf32> to vector<64x64xf32>
    %88 = arith.addf %85, %87 : vector<64x64xf32>
    %cst_40 = arith.constant 0.000000e+00 : f32
    %89 = vector.broadcast %cst_40 : f32 to vector<64x64xf32>
    %90 = arith.maximumf %88, %89 : vector<64x64xf32>
    %91 = vector.shape_cast %90 : vector<64x64xf32> to vector<4x2x8x64xf32>
    %92 = vector.extract_strided_slice %91 {offsets = [0, 0, 0, 0], sizes = [4, 1, 8, 64], strides = [1, 1, 1, 1]} : vector<4x2x8x64xf32> to vector<4x1x8x64xf32>
    %93 = vector.shape_cast %92 : vector<4x1x8x64xf32> to vector<4x8x64xf32>
    %94 = vector.extract_strided_slice %91 {offsets = [0, 1, 0, 0], sizes = [4, 1, 8, 64], strides = [1, 1, 1, 1]} : vector<4x2x8x64xf32> to vector<4x1x8x64xf32>
    %95 = vector.shape_cast %94 : vector<4x1x8x64xf32> to vector<4x8x64xf32>
    %96 = arith.maximumf %93, %95 : vector<4x8x64xf32>
    %97 = vector.shape_cast %96 : vector<4x8x64xf32> to vector<4x4x2x64xf32>
    %98 = vector.extract_strided_slice %97 {offsets = [0, 0, 0, 0], sizes = [4, 4, 1, 64], strides = [1, 1, 1, 1]} : vector<4x4x2x64xf32> to vector<4x4x1x64xf32>
    %99 = vector.shape_cast %98 : vector<4x4x1x64xf32> to vector<4x4x64xf32>
    %100 = vector.extract_strided_slice %97 {offsets = [0, 0, 1, 0], sizes = [4, 4, 1, 64], strides = [1, 1, 1, 1]} : vector<4x4x2x64xf32> to vector<4x4x1x64xf32>
    %101 = vector.shape_cast %100 : vector<4x4x1x64xf32> to vector<4x4x64xf32>
    %102 = arith.maximumf %99, %101 : vector<4x4x64xf32>
    %103 = vector.shape_cast %102 : vector<4x4x64xf32> to vector<16x64xf32>
    %c0_41 = arith.constant 0 : index
    %c0_42 = arith.constant 0 : index
    %104 = vector.load %arg6[%c0_41, %c0_42] : memref<64x128xf32, #tpu.memory_space<vmem>>, vector<64x128xf32>
    %cst_43 = arith.constant dense<0.000000e+00> : vector<16x128xf32>
    %105 = tpu.matmul %103, %104, %cst_43 {dimension_numbers = #tpu.dot_dimension_numbers<[1], [0], [0], [1], [0, 0, 1, 1], [], []>} : vector<16x64xf32>, vector<64x128xf32>, vector<16x128xf32> -> vector<16x128xf32>
    %c0_44 = arith.constant 0 : index
    %c0_45 = arith.constant 0 : index
    %106 = vector.load %arg7[%c0_44, %c0_45] : memref<1x128xf32, #tpu.memory_space<vmem>>, vector<1x128xf32>
    %107 = vector.broadcast %106 : vector<1x128xf32> to vector<16x128xf32>
    %108 = arith.addf %105, %107 : vector<16x128xf32>
    %cst_46 = arith.constant 0.000000e+00 : f32
    %109 = vector.broadcast %cst_46 : f32 to vector<16x128xf32>
    %110 = arith.maximumf %108, %109 : vector<16x128xf32>
    %c0_47 = arith.constant 0 : index
    %c0_48 = arith.constant 0 : index
    %111 = vector.load %arg8[%c0_47, %c0_48] : memref<128x32xf32, #tpu.memory_space<vmem>>, vector<128x32xf32>
    %cst_49 = arith.constant dense<0.000000e+00> : vector<16x32xf32>
    %112 = tpu.matmul %110, %111, %cst_49 {dimension_numbers = #tpu.dot_dimension_numbers<[1], [0], [0], [1], [0, 0, 1, 1], [], []>} : vector<16x128xf32>, vector<128x32xf32>, vector<16x32xf32> -> vector<16x32xf32>
    %c0_50 = arith.constant 0 : index
    %c0_51 = arith.constant 0 : index
    %113 = vector.load %arg9[%c0_50, %c0_51] : memref<1x32xf32, #tpu.memory_space<vmem>>, vector<1x32xf32>
    %114 = vector.broadcast %113 : vector<1x32xf32> to vector<16x32xf32>
    %115 = arith.addf %112, %114 : vector<16x32xf32>
    %116 = vector.shape_cast %115 : vector<16x32xf32> to vector<1x16x32xf32>
    %c0_52 = arith.constant 0 : index
    %c0_53 = arith.constant 0 : index
    %c0_54 = arith.constant 0 : index
    %117 = vector.load %arg10[%c0_52, %c0_53, %c0_54] : memref<1x16x32xf32, #tpu.memory_space<vmem>>, vector<1x16x32xf32>
    tpu.vector_store %arg10[%c0_52, %c0_53, %c0_54], %116 {strides = array<i32>} : memref<1x16x32xf32, #tpu.memory_space<vmem>>, vector<1x16x32xf32>,
    return
  }
  func.func @transform_0(%arg0: i32) -> (i32, i32, i32) {
    %c0_i32 = arith.constant 0 : i32
    %c0_i32_0 = arith.constant 0 : i32
    %c0_i32_1 = arith.constant 0 : i32
    return %arg0, %c0_i32, %c0_i32_0 : i32, i32, i32
  }
  func.func @transform_1(%arg0: i32) -> (i32, i32) {
    %c0_i32 = arith.constant 0 : i32
    %c0_i32_0 = arith.constant 0 : i32
    %c0_i32_1 = arith.constant 0 : i32
    return %c0_i32, %c0_i32_0 : i32, i32
  }
  func.func @transform_2(%arg0: i32) -> (i32, i32) {
    %c0_i32 = arith.constant 0 : i32
    %c0_i32_0 = arith.constant 0 : i32
    %c0_i32_1 = arith.constant 0 : i32
    return %c0_i32, %c0_i32_0 : i32, i32
  }
  func.func @transform_3(%arg0: i32) -> (i32, i32, i32) {
    %c0_i32 = arith.constant 0 : i32
    %c0_i32_0 = arith.constant 0 : i32
    %c0_i32_1 = arith.constant 0 : i32
    %c0_i32_2 = arith.constant 0 : i32
    return %c0_i32, %c0_i32_0, %c0_i32_1 : i32, i32, i32
  }
  func.func @transform_4(%arg0: i32) -> (i32, i32) {
    %c0_i32 = arith.constant 0 : i32
    %c0_i32_0 = arith.constant 0 : i32
    %c0_i32_1 = arith.constant 0 : i32
    return %c0_i32, %c0_i32_0 : i32, i32
  }
  func.func @transform_5(%arg0: i32) -> (i32, i32) {
    %c0_i32 = arith.constant 0 : i32
    %c0_i32_0 = arith.constant 0 : i32
    %c0_i32_1 = arith.constant 0 : i32
    return %c0_i32, %c0_i32_0 : i32, i32
  }
  func.func @transform_6(%arg0: i32) -> (i32, i32) {
    %c0_i32 = arith.constant 0 : i32
    %c0_i32_0 = arith.constant 0 : i32
    %c0_i32_1 = arith.constant 0 : i32
    return %c0_i32, %c0_i32_0 : i32, i32
  }
  func.func @transform_7(%arg0: i32) -> (i32, i32) {
    %c0_i32 = arith.constant 0 : i32
    %c0_i32_0 = arith.constant 0 : i32
    %c0_i32_1 = arith.constant 0 : i32
    return %c0_i32, %c0_i32_0 : i32, i32
  }
  func.func @transform_8(%arg0: i32) -> (i32, i32) {
    %c0_i32 = arith.constant 0 : i32
    %c0_i32_0 = arith.constant 0 : i32
    %c0_i32_1 = arith.constant 0 : i32
    return %c0_i32, %c0_i32_0 : i32, i32
  }
  func.func @transform_9(%arg0: i32) -> (i32, i32, i32) {
    %c0_i32 = arith.constant 0 : i32
    %c0_i32_0 = arith.constant 0 : i32
    %c0_i32_1 = arith.constant 0 : i32
    return %arg0, %c0_i32, %c0_i32_0 : i32, i32, i32
  }
}

</mosaic_0001>

<llo_original>
// kernel: student_unet_forward.1
$region0: #{student_unet_forward.1}
  #allocation0 [shape = 'u32[]', space=smem, size = 0x4, offset = 0x4, fixed_abs, tag = 'smem constant byte address 0x4 - core index']
  #allocation1 [shape = 'u32[72,128]{1,0:T(1,128)}', space=vmem, size = 0x9000, scoped, tag = 'internal scratch']
  %s0 = inlined_call_operand.vmem [shape: f32[2,256,32], index: 0, kind: input, shape index: {}]
  %s1 = inlined_call_operand.vmem [shape: f32[32,32], index: 1, kind: input, shape index: {}]
  %s2 = inlined_call_operand.vmem [shape: f32[1,32], index: 2, kind: input, shape index: {}]
  %s3 = inlined_call_operand.vmem [shape: f32[9,32,64], index: 3, kind: input, shape index: {}]
  %s4 = inlined_call_operand.vmem [shape: f32[1,64], index: 4, kind: input, shape index: {}]
  %s5 = inlined_call_operand.vmem [shape: f32[64,128], index: 5, kind: input, shape index: {}]
  %s6 = inlined_call_operand.vmem [shape: f32[1,128], index: 6, kind: input, shape index: {}]
  %s7 = inlined_call_operand.vmem [shape: f32[128,32], index: 7, kind: input, shape index: {}]
  %s8 = inlined_call_operand.vmem [shape: f32[1,32], index: 8, kind: input, shape index: {}]
  %s9 = inlined_call_operand.vmem [shape: f32[2,16,32], index: 9, kind: output, shape index: {}]
  %s10 = sld [smem:[#allocation0]]
  $region69: #{student_unet_forward.1} parent=0
    _
  %s12 = ssub.s32 1, %s10
  %s13 = scalar_select 0, %s12, %s10
  loop: start=0, step=1, limit=4
  $region2: #{student_unet_forward.1} parent=0 // loop_pre_header
    _
  $region3: #{student_unet_forward.1} parent=0 // loop_header
    %s15 = sphi 0, %s19
    %p16 = scmp.ge.s32.totalorder %s15, 4
    %s25 = sphi 0, %s27
    %s28 = sphi 0, %s25
    %s29 = sphi 0, %s28
    %s45 = sphi 0, %s29
    %s49 = sphi 0, %s49
    %s51 = sphi 0, %s49
    %s52 = sphi 0, %s51
    %s66 = sphi 0, %s52
    %s70 = sphi 0, %s70
    %s72 = sphi 0, %s70
    %s73 = sphi 0, %s72
    %s87 = sphi 0, %s73
    %s91 = sphi 0, %s91
    %s93 = sphi 0, %s91
    %s94 = sphi 0, %s93
    %s108 = sphi 0, %s94
    %s112 = sphi 0, %s112
    %s114 = sphi 0, %s112
    %s115 = sphi 0, %s114
    %s129 = sphi 0, %s115
    %s133 = sphi 0, %s133
    %s135 = sphi 0, %s133
    %s136 = sphi 0, %s135
    %s150 = sphi 0, %s136
    %s154 = sphi 0, %s154
    %s156 = sphi 0, %s154
    %s157 = sphi 0, %s156
    %s171 = sphi 0, %s157
    %s175 = sphi 0, %s175
    %s177 = sphi 0, %s175
    %s178 = sphi 0, %s177
    %s192 = sphi 0, %s178
    %s196 = sphi 0, %s196
    %s198 = sphi 0, %s196
    %s199 = sphi 0, %s198
    %s213 = sphi 0, %s199
    %s219 = sphi 0, %s221
    %s222 = sphi 0, %s219
    %s223 = sphi 0, %s222
    %s239 = sphi 0, %s223
  $region4: #{student_unet_forward.1} parent=0 // loop_header_branch
    %18 = sbr.rel (%p16) target = $region8
  $region5: #{student_unet_forward.1} parent=0 // loop_body
    %s20 = ssub.s32 %s15, 1
    %s21 = ssub.s32 %s15, 2
    %s22 = sadd.s32 %s15, 1
    %s23 = ssub.s32 %s15, %s22
    %p24 = scmp.eq.s32.totalorder %s23, 0
    %s26 = sadd.s32 %s25, 1
    %s27 = scalar_select %p24, %s25, %s26
    %p30 = pneg %p24
    %p31 = scmp.eq.s32.totalorder %s15, 1
    %p32 = por %p30, %p31
    %p33 = scmp.ne.s32.totalorder %s25, %s28
    %p34 = scmp.eq.s32.totalorder %s15, 0
    %p35 = por %p33, %p34
    %p36 = scmp.ne.s32.totalorder %s25, %s28
    %p37 = scmp.eq.s32.totalorder %s20, 1
    %p38 = por %p36, %p37
    %p39 = scmp.ne.s32.totalorder %s28, %s29
    %p40 = scmp.eq.s32.totalorder %s20, 0
    %p41 = por %p39, %p40
    %p42 = scmp.ne.s32.totalorder %s28, %s29
    %p43 = scmp.eq.s32.totalorder %s21, 1
    %p44 = por %p42, %p43
    %p46 = scmp.ne.s32.totalorder %s29, %s45
    %p47 = scmp.eq.s32.totalorder %s21, 0
    %p48 = por %p46, %p47
    %s50 = sadd.s32 %s49, 1
    %p53 = scmp.eq.s32.totalorder %s15, 1
    %p54 = scmp.ne.s32.totalorder %s49, %s51
    %p55 = scmp.eq.s32.totalorder %s15, 0
    %p56 = por %p54, %p55
    %p57 = scmp.ne.s32.totalorder %s49, %s51
    %p58 = scmp.eq.s32.totalorder %s20, 1
    %p59 = por %p57, %p58
    %p60 = scmp.ne.s32.totalorder %s51, %s52
    %p61 = scmp.eq.s32.totalorder %s20, 0
    %p62 = por %p60, %p61
    %p63 = scmp.ne.s32.totalorder %s51, %s52
    %p64 = scmp.eq.s32.totalorder %s21, 1
    %p65 = por %p63, %p64
    %p67 = scmp.ne.s32.totalorder %s52, %s66
    %p68 = scmp.eq.s32.totalorder %s21, 0
    %p69 = por %p67, %p68
    %s71 = sadd.s32 %s70, 1
    %p74 = scmp.eq.s32.totalorder %s15, 1
    %p75 = scmp.ne.s32.totalorder %s70, %s72
    %p76 = scmp.eq.s32.totalorder %s15, 0
    %p77 = por %p75, %p76
    %p78 = scmp.ne.s32.totalorder %s70, %s72
    %p79 = scmp.eq.s32.totalorder %s20, 1
    %p80 = por %p78, %p79
    %p81 = scmp.ne.s32.totalorder %s72, %s73
    %p82 = scmp.eq.s32.totalorder %s20, 0
    %p83 = por %p81, %p82
    %p84 = scmp.ne.s32.totalorder %s72, %s73
    %p85 = scmp.eq.s32.totalorder %s21, 1
    %p86 = por %p84, %p85
    %p88 = scmp.ne.s32.totalorder %s73, %s87
    %p89 = scmp.eq.s32.totalorder %s21, 0
    %p90 = por %p88, %p89
    %s92 = sadd.s32 %s91, 1
    %p95 = scmp.eq.s32.totalorder %s15, 1
    %p96 = scmp.ne.s32.totalorder %s91, %s93
    %p97 = scmp.eq.s32.totalorder %s15, 0
    %p98 = por %p96, %p97
    %p99 = scmp.ne.s32.totalorder %s91, %s93
    %p100 = scmp.eq.s32.totalorder %s20, 1
    %p101 = por %p99, %p100
    %p102 = scmp.ne.s32.totalorder %s93, %s94
    %p103 = scmp.eq.s32.totalorder %s20, 0
    %p104 = por %p102, %p103
    %p105 = scmp.ne.s32.totalorder %s93, %s94
    %p106 = scmp.eq.s32.totalorder %s21, 1
    %p107 = por %p105, %p106
    %p109 = scmp.ne.s32.totalorder %s94, %s108
    %p110 = scmp.eq.s32.totalorder %s21, 0
    %p111 = por %p109, %p110
    %s113 = sadd.s32 %s112, 1
    %p116 = scmp.eq.s32.totalorder %s15, 1
    %p117 = scmp.ne.s32.totalorder %s112, %s114
    %p118 = scmp.eq.s32.totalorder %s15, 0
    %p119 = por %p117, %p118
    %p120 = scmp.ne.s32.totalorder %s112, %s114
    %p121 = scmp.eq.s32.totalorder %s20, 1
    %p122 = por %p120, %p121
    %p123 = scmp.ne.s32.totalorder %s114, %s115
    %p124 = scmp.eq.s32.totalorder %s20, 0
    %p125 = por %p123, %p124
    %p126 = scmp.ne.s32.totalorder %s114, %s115
    %p127 = scmp.eq.s32.totalorder %s21, 1
    %p128 = por %p126, %p127
    %p130 = scmp.ne.s32.totalorder %s115, %s129
    %p131 = scmp.eq.s32.totalorder %s21, 0
    %p132 = por %p130, %p131
    %s134 = sadd.s32 %s133, 1
    %p137 = scmp.eq.s32.totalorder %s15, 1
    %p138 = scmp.ne.s32.totalorder %s133, %s135
    %p139 = scmp.eq.s32.totalorder %s15, 0
    %p140 = por %p138, %p139
    %p141 = scmp.ne.s32.totalorder %s133, %s135
    %p142 = scmp.eq.s32.totalorder %s20, 1
    %p143 = por %p141, %p142
    %p144 = scmp.ne.s32.totalorder %s135, %s136
    %p145 = scmp.eq.s32.totalorder %s20, 0
    %p146 = por %p144, %p145
    %p147 = scmp.ne.s32.totalorder %s135, %s136
    %p148 = scmp.eq.s32.totalorder %s21, 1
    %p149 = por %p147, %p148
    %p151 = scmp.ne.s32.totalorder %s136, %s150
    %p152 = scmp.eq.s32.totalorder %s21, 0
    %p153 = por %p151, %p152
    %s155 = sadd.s32 %s154, 1
    %p158 = scmp.eq.s32.totalorder %s15, 1
    %p159 = scmp.ne.s32.totalorder %s154, %s156
    %p160 = scmp.eq.s32.totalorder %s15, 0
    %p161 = por %p159, %p160
    %p162 = scmp.ne.s32.totalorder %s154, %s156
    %p163 = scmp.eq.s32.totalorder %s20, 1
    %p164 = por %p162, %p163
    %p165 = scmp.ne.s32.totalorder %s156, %s157
    %p166 = scmp.eq.s32.totalorder %s20, 0
    %p167 = por %p165, %p166
    %p168 = scmp.ne.s32.totalorder %s156, %s157
    %p169 = scmp.eq.s32.totalorder %s21, 1
    %p170 = por %p168, %p169
    %p172 = scmp.ne.s32.totalorder %s157, %s171
    %p173 = scmp.eq.s32.totalorder %s21, 0
    %p174 = por %p172, %p173
    %s176 = sadd.s32 %s175, 1
    %p179 = scmp.eq.s32.totalorder %s15, 1
    %p180 = scmp.ne.s32.totalorder %s175, %s177
    %p181 = scmp.eq.s32.totalorder %s15, 0
    %p182 = por %p180, %p181
    %p183 = scmp.ne.s32.totalorder %s175, %s177
    %p184 = scmp.eq.s32.totalorder %s20, 1
    %p185 = por %p183, %p184
    %p186 = scmp.ne.s32.totalorder %s177, %s178
    %p187 = scmp.eq.s32.totalorder %s20, 0
    %p188 = por %p186, %p187
    %p189 = scmp.ne.s32.totalorder %s177, %s178
    %p190 = scmp.eq.s32.totalorder %s21, 1
    %p191 = por %p189, %p190
    %p193 = scmp.ne.s32.totalorder %s178, %s192
    %p194 = scmp.eq.s32.totalorder %s21, 0
    %p195 = por %p193, %p194
    %s197 = sadd.s32 %s196, 1
    %p200 = scmp.eq.s32.totalorder %s15, 1
    %p201 = scmp.ne.s32.totalorder %s196, %s198
    %p202 = scmp.eq.s32.totalorder %s15, 0
    %p203 = por %p201, %p202
    %p204 = scmp.ne.s32.totalorder %s196, %s198
    %p205 = scmp.eq.s32.totalorder %s20, 1
    %p206 = por %p204, %p205
    %p207 = scmp.ne.s32.totalorder %s198, %s199
    %p208 = scmp.eq.s32.totalorder %s20, 0
    %p209 = por %p207, %p208
    %p210 = scmp.ne.s32.totalorder %s198, %s199
    %p211 = scmp.eq.s32.totalorder %s21, 1
    %p212 = por %p210, %p211
    %p214 = scmp.ne.s32.totalorder %s199, %s213
    %p215 = scmp.eq.s32.totalorder %s21, 0
    %p216 = por %p214, %p215
    %s217 = ssub.s32 %s15, %s22
    %p218 = scmp.eq.s32.totalorder %s217, 0
    %s220 = sadd.s32 %s219, 1
    %s221 = scalar_select %p218, %s219, %s220
    %p224 = pneg %p218
    %p225 = scmp.eq.s32.totalorder %s15, 1
    %p226 = por %p224, %p225
    %p227 = scmp.ne.s32.totalorder %s219, %s222
    %p228 = scmp.eq.s32.totalorder %s15, 0
    %p229 = por %p227, %p228
    %p230 = scmp.ne.s32.totalorder %s219, %s222
    %p231 = scmp.eq.s32.totalorder %s20, 1
    %p232 = por %p230, %p231
    %p233 = scmp.ne.s32.totalorder %s222, %s223
    %p234 = scmp.eq.s32.totalorder %s20, 0
    %p235 = por %p233, %p234
    %p236 = scmp.ne.s32.totalorder %s222, %s223
    %p237 = scmp.eq.s32.totalorder %s21, 1
    %p238 = por %p236, %p237
    %p240 = scmp.ne.s32.totalorder %s223, %s239
    %p241 = scmp.eq.s32.totalorder %s21, 0
    %p242 = por %p240, %p241
    %p243 = scmp.le.s32.totalorder 1, %s15
    %p244 = scmp.lt.s32.totalorder %s15, 3
    %p245 = pnand %p243, %p244
    %p246 = pneg %p245
    // Predicated region
    $region9: #{student_unet_forward.1} parent=5 // pred_check
      _
    $region10: #{student_unet_forward.1} parent=5 // pred_check_branch
      %248 = sbr.rel (%p245) target = $region12
    $region11: #{student_unet_forward.1} parent=5 // pred_region
      %s249 = ssub.s32 %s15, 1
      // Predicated region
      $region13: #{student_unet_forward.1} parent=11 // pred_check
        %p250 = pneg %p62
      $region14: #{student_unet_forward.1} parent=11 // pred_check_branch
        %252 = sbr.rel (%p250) target = $region16
      $region15: #{student_unet_forward.1} parent=11 // pred_region
        _
      $region16: #{student_unet_forward.1} parent=11 // pred_fallthru
        _
      // Predicated region
      $region17: #{student_unet_forward.1} parent=11 // pred_check
        %p253 = pneg %p83
      $region18: #{student_unet_forward.1} parent=11 // pred_check_branch
        %255 = sbr.rel (%p253) target = $region20
      $region19: #{student_unet_forward.1} parent=11 // pred_region
        _
      $region20: #{student_unet_forward.1} parent=11 // pred_fallthru
        _
      // Predicated region
      $region21: #{student_unet_forward.1} parent=11 // pred_check
        %p256 = pneg %p104
      $region22: #{student_unet_forward.1} parent=11 // pred_check_branch
        %258 = sbr.rel (%p256) target = $region24
      $region23: #{student_unet_forward.1} parent=11 // pred_region
        _
      $region24: #{student_unet_forward.1} parent=11 // pred_fallthru
        _
      // Predicated region
      $region25: #{student_unet_forward.1} parent=11 // pred_check
        %p259 = pneg %p125
      $region26: #{student_unet_forward.1} parent=11 // pred_check_branch
        %261 = sbr.rel (%p259) target = $region28
      $region27: #{student_unet_forward.1} parent=11 // pred_region
        _
      $region28: #{student_unet_forward.1} parent=11 // pred_fallthru
        _
      // Predicated region
      $region29: #{student_unet_forward.1} parent=11 // pred_check
        %p262 = pneg %p146
      $region30: #{student_unet_forward.1} parent=11 // pred_check_branch
        %264 = sbr.rel (%p262) target = $region32
      $region31: #{student_unet_forward.1} parent=11 // pred_region
        _
      $region32: #{student_unet_forward.1} parent=11 // pred_fallthru
        _
      // Predicated region
      $region33: #{student_unet_forward.1} parent=11 // pred_check
        %p265 = pneg %p167
      $region34: #{student_unet_forward.1} parent=11 // pred_check_branch
        %267 = sbr.rel (%p265) target = $region36
      $region35: #{student_unet_forward.1} parent=11 // pred_region
        _
      $region36: #{student_unet_forward.1} parent=11 // pred_fallthru
        _
      // Predicated region
      $region37: #{student_unet_forward.1} parent=11 // pred_check
        %p268 = pneg %p188
      $region38: #{student_unet_forward.1} parent=11 // pred_check_branch
        %270 = sbr.rel (%p268) target = $region40
      $region39: #{student_unet_forward.1} parent=11 // pred_region
        _
      $region40: #{student_unet_forward.1} parent=11 // pred_fallthru
        _
      // Predicated region
      $region41: #{student_unet_forward.1} parent=11 // pred_check
        %p271 = pneg %p209
      $region42: #{student_unet_forward.1} parent=11 // pred_check_branch
        %273 = sbr.rel (%p271) target = $region44
      $region43: #{student_unet_forward.1} parent=11 // pred_region
        _
      $region44: #{student_unet_forward.1} parent=11 // pred_fallthru
        _
    $region12: #{student_unet_forward.1} parent=5 // pred_fallthru
      _
    %p274 = scmp.lt.s32.totalorder %s15, 2
    // Predicated region
    $region45: #{student_unet_forward.1} parent=5 // pred_check
      %p275 = pneg %p274
    $region46: #{student_unet_forward.1} parent=5 // pred_check_branch
      %277 = sbr.rel (%p275) target = $region48
    $region47: #{student_unet_forward.1} parent=5 // pred_region
      // Predicated region
      $region49: #{student_unet_forward.1} parent=47 // pred_check
        %p278 = pneg %p35
      $region50: #{student_unet_forward.1} parent=47 // pred_check_branch
        %280 = sbr.rel (%p278) target = $region52
      $region51: #{student_unet_forward.1} parent=47 // pred_region
        %p281 = scmp.lt.s32.totalorder %s15, 1
        %s282 = scalar_select %p281, %s15, 1
        %s283 = smul.addr %s282, 32
        %s284 = smul.addr %s283, 8
        %s285 = scalar_lea.vmem %s0, %s284
      $region52: #{student_unet_forward.1} parent=47 // pred_fallthru
        _
    $region48: #{student_unet_forward.1} parent=5 // pred_fallthru
      _
    %p286 = scmp.le.s32.totalorder 1, %s15
    %p287 = scmp.lt.s32.totalorder %s15, 3
    %p288 = pnand %p286, %p287
    %p289 = pneg %p288
    // Predicated region
    $region53: #{student_unet_forward.1} parent=5 // pred_check
      _
    $region54: #{student_unet_forward.1} parent=5 // pred_check_branch
      %291 = sbr.rel (%p288) target = $region56
    $region55: #{student_unet_forward.1} parent=5 // pred_region
      %s292 = ssub.s32 %s15, 1
      %p293 = scmp.lt.s32.totalorder %s20, 1
      %s294 = scalar_select %p293, %s20, 1
      %s295 = smul.addr %s294, 32
      %s296 = smul.addr %s295, 8
      %s297 = scalar_lea.vmem %s0, %s296
      %p298 = pneg %p41
      %p299 = pneg %p38
      %p300 = pneg %p62
      %p301 = pneg %p59
      %p302 = pneg %p83
      %p303 = pneg %p80
      %p304 = pneg %p104
      %p305 = pneg %p101
      %p306 = pneg %p125
      %p307 = pneg %p122
      %p308 = pneg %p146
      %p309 = pneg %p143
      %p310 = pneg %p167
      %p311 = pneg %p164
      %p312 = pneg %p188
      %p313 = pneg %p185
      %p314 = pneg %p209
      %p315 = pneg %p206
      %p316 = pneg %p235
      %p317 = pneg %p232
      %p318 = scmp.lt.s32.totalorder %s20, 1
      %s319 = scalar_select %p318, %s20, 1
      %s320 = smul.addr %s319, 2
      %s321 = smul.addr %s320, 8
      %s322 = scalar_lea.vmem %s9, %s321
      %p323 = scmp.lt.s32.totalorder %s20, 1
      %s324 = scalar_select %p323, %s20, 1
      %s325 = smul.addr %s324, 32
      %s326 = smul.addr %s325, 8
      %s327 = scalar_lea.vmem %s0, %s326
      %p328 = scmp.lt.s32.totalorder %s20, 1
      %s329 = scalar_select %p328, %s20, 1
      %s330 = smul.addr %s329, 2
      %s331 = smul.addr %s330, 8
      %s332 = scalar_lea.vmem %s9, %s331
      %v333 = vld [vmem:[%s327] sm:$0xff]
      %v334 = vld [vmem:[%s327 + $0x8] sm:$0xff]
      %v335 = vld [vmem:[%s327 + $0x10] sm:$0xff]
      %v336 = vld [vmem:[%s327 + $0x18] sm:$0xff]
      %v337 = vld [vmem:[%s327 + $0x20] sm:$0xff]
      %v338 = vld [vmem:[%s327 + $0x28] sm:$0xff]
      %v339 = vld [vmem:[%s327 + $0x30] sm:$0xff]
      %v340 = vld [vmem:[%s327 + $0x38] sm:$0xff]
      %v341 = vld [vmem:[%s327 + $0x40] sm:$0xff]
      %v342 = vld [vmem:[%s327 + $0x48] sm:$0xff]
      %v343 = vld [vmem:[%s327 + $0x50] sm:$0xff]
      %v344 = vld [vmem:[%s327 + $0x58] sm:$0xff]
      %v345 = vld [vmem:[%s327 + $0x60] sm:$0xff]
      %v346 = vld [vmem:[%s327 + $0x68] sm:$0xff]
      %v347 = vld [vmem:[%s327 + $0x70] sm:$0xff]
      %v348 = vld [vmem:[%s327 + $0x78] sm:$0xff]
      %v349 = vld [vmem:[%s327 + $0x80] sm:$0xff]
      %v350 = vld [vmem:[%s327 + $0x88] sm:$0xff]
      %v351 = vld [vmem:[%s327 + $0x90] sm:$0xff]
      %v352 = vld [vmem:[%s327 + $0x98] sm:$0xff]
      %v353 = vld [vmem:[%s327 + $0xa0] sm:$0xff]
      %v354 = vld [vmem:[%s327 + $0xa8] sm:$0xff]
      %v355 = vld [vmem:[%s327 + $0xb0] sm:$0xff]
      %v356 = vld [vmem:[%s327 + $0xb8] sm:$0xff]
      %v357 = vld [vmem:[%s327 + $0xc0] sm:$0xff]
      %v358 = vld [vmem:[%s327 + $0xc8] sm:$0xff]
      %v359 = vld [vmem:[%s327 + $0xd0] sm:$0xff]
      %v360 = vld [vmem:[%s327 + $0xd8] sm:$0xff]
      %v361 = vld [vmem:[%s327 + $0xe0] sm:$0xff]
      %v362 = vld [vmem:[%s327 + $0xe8] sm:$0xff]
      %v363 = vld [vmem:[%s327 + $0xf0] sm:$0xff]
      %v364 = vld [vmem:[%s327 + $0xf8] sm:$0xff]
      %v365 = vld [vmem:[%s1] sm:$0xff]
      %v366 = vld [vmem:[%s1 + $0x8] sm:$0xff]
      %v367 = vld [vmem:[%s1 + $0x10] sm:$0xff]
      %v368 = vld [vmem:[%s1 + $0x18] sm:$0xff]
      %v369 = vld [vmem:[%s2] sm:$0x1]
      %v371 = vperm.slane %v369, 0
      %vm373 = vcmask 261120
      %v375 = vsel %vm373, %v333, 0
      %v378 = vsel %vm373, %v334, 0
      %v381 = vsel %vm373, %v335, 0
      %v384 = vsel %vm373, %v336, 0
      %v387 = vsel %vm373, %v337, 0
      %v390 = vsel %vm373, %v338, 0
      %v393 = vsel %vm373, %v339, 0
      %v396 = vsel %vm373, %v340, 0
      %v399 = vsel %vm373, %v341, 0
      %v402 = vsel %vm373, %v342, 0
      %v405 = vsel %vm373, %v343, 0
      %v408 = vsel %vm373, %v344, 0
      %v411 = vsel %vm373, %v345, 0
      %v414 = vsel %vm373, %v346, 0
      %v417 = vsel %vm373, %v347, 0
      %v420 = vsel %vm373, %v348, 0
      %v423 = vsel %vm373, %v349, 0
      %v426 = vsel %vm373, %v350, 0
      %v429 = vsel %vm373, %v351, 0
      %v432 = vsel %vm373, %v352, 0
      %v435 = vsel %vm373, %v353, 0
      %v438 = vsel %vm373, %v354, 0
      %v441 = vsel %vm373, %v355, 0
      %v444 = vsel %vm373, %v356, 0
      %v447 = vsel %vm373, %v357, 0
      %v450 = vsel %vm373, %v358, 0
      %v453 = vsel %vm373, %v359, 0
      %v456 = vsel %vm373, %v360, 0
      %v459 = vsel %vm373, %v361, 0
      %v462 = vsel %vm373, %v362, 0
      %v465 = vsel %vm373, %v363, 0
      %v468 = vsel %vm373, %v364, 0
      %470 = vmatpush.msra.mxu0 0.0
      %471 = vmatpush.msra.mxu0 0.0
      %472 = vmatpush.msra.mxu0 0.0
      %473 = vmatpush.msra.mxu0 0.0
      %474 = vmatpush.msra.mxu0 0.0
      %475 = vmatpush.msra.mxu0 0.0
      %476 = vmatpush.msra.mxu0 0.0
      %477 = vmatpush.msra.mxu0 0.0
      %478 = vmatpush.msra.mxu0 0.0
      %479 = vmatpush.msra.mxu0 0.0
      %480 = vmatpush.msra.mxu0 0.0
      %481 = vmatpush.msra.mxu0 0.0
      %482 = vmatpush.msra.mxu0 %v368
      %483 = vmatpush.msra.mxu0 %v367
      %484 = vmatpush.msra.mxu0 %v366
      %485 = vmatpush.msra.mxu0 %v365
      %486 = vmatmul.f32.gmra.mxu0 %v375
      %v487 = vpop.f32.mrf.mxu0
      %v488 = vadd.f32 %v371, %v487
      %489 = vmatmul.f32.gmra.mxu0 %v378
      %v490 = vpop.f32.mrf.mxu0
      %v491 = vadd.f32 %v371, %v490
      %492 = vmatmul.f32.gmra.mxu0 %v381
      %v493 = vpop.f32.mrf.mxu0
      %v494 = vadd.f32 %v371, %v493
      %495 = vmatmul.f32.gmra.mxu0 %v384
      %v496 = vpop.f32.mrf.mxu0
      %v497 = vadd.f32 %v371, %v496
      %498 = vmatmul.f32.gmra.mxu0 %v387
      %v499 = vpop.f32.mrf.mxu0
      %v500 = vadd.f32 %v371, %v499
      %501 = vmatmul.f32.gmra.mxu0 %v390
      %v502 = vpop.f32.mrf.mxu0
      %v503 = vadd.f32 %v371, %v502
      %504 = vmatmul.f32.gmra.mxu0 %v393
      %v505 = vpop.f32.mrf.mxu0
      %v506 = vadd.f32 %v371, %v505
      %507 = vmatmul.f32.gmra.mxu0 %v396
      %v508 = vpop.f32.mrf.mxu0
      %v509 = vadd.f32 %v371, %v508
      %510 = vmatmul.f32.gmra.mxu0 %v399
      %v511 = vpop.f32.mrf.mxu0
      %v512 = vadd.f32 %v371, %v511
      %513 = vmatmul.f32.gmra.mxu0 %v402
      %v514 = vpop.f32.mrf.mxu0
      %v515 = vadd.f32 %v371, %v514
      %516 = vmatmul.f32.gmra.mxu0 %v405
      %v517 = vpop.f32.mrf.mxu0
      %v518 = vadd.f32 %v371, %v517
      %519 = vmatmul.f32.gmra.mxu0 %v408
      %v520 = vpop.f32.mrf.mxu0
      %v521 = vadd.f32 %v371, %v520
      %522 = vmatmul.f32.gmra.mxu0 %v411
      %v523 = vpop.f32.mrf.mxu0
      %v524 = vadd.f32 %v371, %v523
      %525 = vmatmul.f32.gmra.mxu0 %v414
      %v526 = vpop.f32.mrf.mxu0
      %v527 = vadd.f32 %v371, %v526
      %528 = vmatmul.f32.gmra.mxu0 %v417
      %v529 = vpop.f32.mrf.mxu0
      %v530 = vadd.f32 %v371, %v529
      %531 = vmatmul.f32.gmra.mxu0 %v420
      %v532 = vpop.f32.mrf.mxu0
      %v533 = vadd.f32 %v371, %v532
      %534 = vmatmul.f32.gmra.mxu0 %v423
      %v535 = vpop.f32.mrf.mxu0
      %v536 = vadd.f32 %v371, %v535
      %537 = vmatmul.f32.gmra.mxu0 %v426
      %v538 = vpop.f32.mrf.mxu0
      %v539 = vadd.f32 %v371, %v538
      %540 = vmatmul.f32.gmra.mxu0 %v429
      %v541 = vpop.f32.mrf.mxu0
      %v542 = vadd.f32 %v371, %v541
      %543 = vmatmul.f32.gmra.mxu0 %v432
      %v544 = vpop.f32.mrf.mxu0
      %v545 = vadd.f32 %v371, %v544
      %546 = vmatmul.f32.gmra.mxu0 %v435
      %v547 = vpop.f32.mrf.mxu0
      %v548 = vadd.f32 %v371, %v547
      %549 = vmatmul.f32.gmra.mxu0 %v438
      %v550 = vpop.f32.mrf.mxu0
      %v551 = vadd.f32 %v371, %v550
      %552 = vmatmul.f32.gmra.mxu0 %v441
      %v553 = vpop.f32.mrf.mxu0
      %v554 = vadd.f32 %v371, %v553
      %555 = vmatmul.f32.gmra.mxu0 %v444
      %v556 = vpop.f32.mrf.mxu0
      %v557 = vadd.f32 %v371, %v556
      %558 = vmatmul.f32.gmra.mxu0 %v447
      %v559 = vpop.f32.mrf.mxu0
      %v560 = vadd.f32 %v371, %v559
      %561 = vmatmul.f32.gmra.mxu0 %v450
      %v562 = vpop.f32.mrf.mxu0
      %v563 = vadd.f32 %v371, %v562
      %564 = vmatmul.f32.gmra.mxu0 %v453
      %v565 = vpop.f32.mrf.mxu0
      %v566 = vadd.f32 %v371, %v565
      %567 = vmatmul.f32.gmra.mxu0 %v456
      %v568 = vpop.f32.mrf.mxu0
      %v569 = vadd.f32 %v371, %v568
      %570 = vmatmul.f32.gmra.mxu0 %v459
      %v571 = vpop.f32.mrf.mxu0
      %v572 = vadd.f32 %v371, %v571
      %573 = vmatmul.f32.gmra.mxu0 %v462
      %v574 = vpop.f32.mrf.mxu0
      %v575 = vadd.f32 %v371, %v574
      %576 = vmatmul.f32.gmra.mxu0 %v465
      %v577 = vpop.f32.mrf.mxu0
      %v578 = vadd.f32 %v371, %v577
      %579 = vmatmul.f32.gmra.mxu0 %v468
      %v580 = vpop.f32.mrf.mxu0
      %v581 = vadd.f32 %v371, %v580
      %582 = vdwg.mxu0
      %v583 = vmax.f32 %v488, 0.0
      %v584 = vmax.f32 %v491, 0.0
      %v585 = vmax.f32 %v494, 0.0
      %v586 = vmax.f32 %v497, 0.0
      %v587 = vmax.f32 %v500, 0.0
      %v588 = vmax.f32 %v503, 0.0
      %v589 = vmax.f32 %v506, 0.0
      %v590 = vmax.f32 %v509, 0.0
      %v591 = vmax.f32 %v512, 0.0
      %v592 = vmax.f32 %v515, 0.0
      %v593 = vmax.f32 %v518, 0.0
      %v594 = vmax.f32 %v521, 0.0
      %v595 = vmax.f32 %v524, 0.0
      %v596 = vmax.f32 %v527, 0.0
      %v597 = vmax.f32 %v530, 0.0
      %v598 = vmax.f32 %v533, 0.0
      %v599 = vmax.f32 %v536, 0.0
      %v600 = vmax.f32 %v539, 0.0
      %v601 = vmax.f32 %v542, 0.0
      %v602 = vmax.f32 %v545, 0.0
      %v603 = vmax.f32 %v548, 0.0
      %v604 = vmax.f32 %v551, 0.0
      %v605 = vmax.f32 %v554, 0.0
      %v606 = vmax.f32 %v557, 0.0
      %v607 = vmax.f32 %v560, 0.0
      %v608 = vmax.f32 %v563, 0.0
      %v609 = vmax.f32 %v566, 0.0
      %v610 = vmax.f32 %v569, 0.0
      %v611 = vmax.f32 %v572, 0.0
      %v612 = vmax.f32 %v575, 0.0
      %v613 = vmax.f32 %v578, 0.0
      %v614 = vmax.f32 %v581, 0.0
      %v615 = vmax.f32 %v583, %v585
      %v616 = vmax.f32 %v584, %v586
      %v617 = vmax.f32 %v587, %v589
      %v618 = vmax.f32 %v588, %v590
      %v619 = vmax.f32 %v591, %v593
      %v620 = vmax.f32 %v592, %v594
      %v621 = vmax.f32 %v595, %v597
      %v622 = vmax.f32 %v596, %v598
      %v623 = vmax.f32 %v599, %v601
      %v624 = vmax.f32 %v600, %v602
      %v625 = vmax.f32 %v603, %v605
      %v626 = vmax.f32 %v604, %v606
      %v627 = vmax.f32 %v607, %v609
      %v628 = vmax.f32 %v608, %v610
      %v629 = vmax.f32 %v611, %v613
      %v630 = vmax.f32 %v612, %v614
      %v647 = vrot.slane %v615, 2
      %v648 = vrot.slane %v615, 4
      %v649 = vrot.slane %v615, 6
      %v650 = vrot.slane %v616, 2
      %v651 = vrot.slane %v616, 4
      %v652 = vrot.slane %v616, 6
      %v653 = vrot.slane %v617, 2
      %v654 = vrot.slane %v617, 4
      %v655 = vrot.slane %v617, 6
      %v656 = vrot.slane %v618, 2
      %v657 = vrot.slane %v618, 4
      %v658 = vrot.slane %v618, 6
      %v659 = vrot.slane %v619, 2
      %v660 = vrot.slane %v619, 4
      %v661 = vrot.slane %v619, 6
      %v662 = vrot.slane %v620, 2
      %v663 = vrot.slane %v620, 4
      %v664 = vrot.slane %v620, 6
      %v665 = vrot.slane %v621, 2
      %v666 = vrot.slane %v621, 4
      %v667 = vrot.slane %v621, 6
      %v668 = vrot.slane %v622, 2
      %v669 = vrot.slane %v622, 4
      %v670 = vrot.slane %v622, 6
      %v671 = vrot.slane %v623, 2
      %v672 = vrot.slane %v623, 4
      %v673 = vrot.slane %v623, 6
      %v674 = vrot.slane %v624, 2
      %v675 = vrot.slane %v624, 4
      %v676 = vrot.slane %v624, 6
      %v677 = vrot.slane %v625, 2
      %v678 = vrot.slane %v625, 4
      %v679 = vrot.slane %v625, 6
      %v680 = vrot.slane %v626, 2
      %v681 = vrot.slane %v626, 4
      %v682 = vrot.slane %v626, 6
      %v683 = vrot.slane %v627, 2
      %v684 = vrot.slane %v627, 4
      %v685 = vrot.slane %v627, 6
      %v686 = vrot.slane %v628, 2
      %v687 = vrot.slane %v628, 4
      %v688 = vrot.slane %v628, 6
      %v689 = vrot.slane %v629, 2
      %v690 = vrot.slane %v629, 4
      %v691 = vrot.slane %v629, 6
      %v692 = vrot.slane %v630, 2
      %v693 = vrot.slane %v630, 4
      %v694 = vrot.slane %v630, 6
      %v743 = vrot.slane %v615, 7
      %v744 = vrot.slane %v743, 2
      %v745 = vrot.slane %v647, 7
      %v746 = vrot.slane %v745, 2
      %v747 = vrot.slane %v648, 7
      %v748 = vrot.slane %v747, 2
      %v749 = vrot.slane %v649, 7
      %v750 = vrot.slane %v749, 2
      %v751 = vrot.slane %v616, 7
      %v752 = vrot.slane %v751, 2
      %v753 = vrot.slane %v650, 7
      %v754 = vrot.slane %v753, 2
      %v755 = vrot.slane %v651, 7
      %v756 = vrot.slane %v755, 2
      %v757 = vrot.slane %v652, 7
      %v758 = vrot.slane %v757, 2
      %v759 = vrot.slane %v617, 7
      %v760 = vrot.slane %v759, 2
      %v761 = vrot.slane %v653, 7
      %v762 = vrot.slane %v761, 2
      %v763 = vrot.slane %v654, 7
      %v764 = vrot.slane %v763, 2
      %v765 = vrot.slane %v655, 7
      %v766 = vrot.slane %v765, 2
      %v767 = vrot.slane %v618, 7
      %v768 = vrot.slane %v767, 2
      %v769 = vrot.slane %v656, 7
      %v770 = vrot.slane %v769, 2
      %v771 = vrot.slane %v657, 7
      %v772 = vrot.slane %v771, 2
      %v773 = vrot.slane %v658, 7
      %v774 = vrot.slane %v773, 2
      %v775 = vrot.slane %v619, 7
      %v776 = vrot.slane %v775, 2
      %v777 = vrot.slane %v659, 7
      %v778 = vrot.slane %v777, 2
      %v779 = vrot.slane %v660, 7
      %v780 = vrot.slane %v779, 2
      %v781 = vrot.slane %v661, 7
      %v782 = vrot.slane %v781, 2
      %v783 = vrot.slane %v620, 7
      %v784 = vrot.slane %v783, 2
      %v785 = vrot.slane %v662, 7
      %v786 = vrot.slane %v785, 2
      %v787 = vrot.slane %v663, 7
      %v788 = vrot.slane %v787, 2
      %v789 = vrot.slane %v664, 7
      %v790 = vrot.slane %v789, 2
      %v791 = vrot.slane %v621, 7
      %v792 = vrot.slane %v791, 2
      %v793 = vrot.slane %v665, 7
      %v794 = vrot.slane %v793, 2
      %v795 = vrot.slane %v666, 7
      %v796 = vrot.slane %v795, 2
      %v797 = vrot.slane %v667, 7
      %v798 = vrot.slane %v797, 2
      %v799 = vrot.slane %v622, 7
      %v800 = vrot.slane %v799, 2
      %v801 = vrot.slane %v668, 7
      %v802 = vrot.slane %v801, 2
      %v803 = vrot.slane %v669, 7
      %v804 = vrot.slane %v803, 2
      %v805 = vrot.slane %v670, 7
      %v806 = vrot.slane %v805, 2
      %v807 = vrot.slane %v623, 7
      %v808 = vrot.slane %v807, 2
      %v809 = vrot.slane %v671, 7
      %v810 = vrot.slane %v809, 2
      %v811 = vrot.slane %v672, 7
      %v812 = vrot.slane %v811, 2
      %v813 = vrot.slane %v673, 7
      %v814 = vrot.slane %v813, 2
      %v815 = vrot.slane %v624, 7
      %v816 = vrot.slane %v815, 2
      %v817 = vrot.slane %v674, 7
      %v818 = vrot.slane %v817, 2
      %v819 = vrot.slane %v675, 7
      %v820 = vrot.slane %v819, 2
      %v821 = vrot.slane %v676, 7
      %v822 = vrot.slane %v821, 2
      %v823 = vrot.slane %v625, 7
      %v824 = vrot.slane %v823, 2
      %v825 = vrot.slane %v677, 7
      %v826 = vrot.slane %v825, 2
      %v827 = vrot.slane %v678, 7
      %v828 = vrot.slane %v827, 2
      %v829 = vrot.slane %v679, 7
      %v830 = vrot.slane %v829, 2
      %v831 = vrot.slane %v626, 7
      %v832 = vrot.slane %v831, 2
      %v833 = vrot.slane %v680, 7
      %v834 = vrot.slane %v833, 2
      %v835 = vrot.slane %v681, 7
      %v836 = vrot.slane %v835, 2
      %v837 = vrot.slane %v682, 7
      %v838 = vrot.slane %v837, 2
      %v839 = vrot.slane %v627, 7
      %v840 = vrot.slane %v839, 2
      %v841 = vrot.slane %v683, 7
      %v842 = vrot.slane %v841, 2
      %v843 = vrot.slane %v684, 7
      %v844 = vrot.slane %v843, 2
      %v845 = vrot.slane %v685, 7
      %v846 = vrot.slane %v845, 2
      %v847 = vrot.slane %v628, 7
      %v848 = vrot.slane %v847, 2
      %v849 = vrot.slane %v686, 7
      %v850 = vrot.slane %v849, 2
      %v851 = vrot.slane %v687, 7
      %v852 = vrot.slane %v851, 2
      %v853 = vrot.slane %v688, 7
      %v854 = vrot.slane %v853, 2
      %v855 = vrot.slane %v629, 7
      %v856 = vrot.slane %v855, 2
      %v857 = vrot.slane %v689, 7
      %v858 = vrot.slane %v857, 2
      %v859 = vrot.slane %v690, 7
      %v860 = vrot.slane %v859, 2
      %v861 = vrot.slane %v691, 7
      %v862 = vrot.slane %v861, 2
      %v863 = vrot.slane %v630, 7
      %v864 = vrot.slane %v863, 2
      %v865 = vrot.slane %v692, 7
      %v866 = vrot.slane %v865, 2
      %v867 = vrot.slane %v693, 7
      %v868 = vrot.slane %v867, 2
      %v869 = vrot.slane %v694, 7
      %v870 = vrot.slane %v869, 2
      %v935 = vmax.f32 %v615, %v744
      %v936 = vmax.f32 %v647, %v746
      %v937 = vmax.f32 %v648, %v748
      %v938 = vmax.f32 %v649, %v750
      %v939 = vmax.f32 %v616, %v752
      %v940 = vmax.f32 %v650, %v754
      %v941 = vmax.f32 %v651, %v756
      %v942 = vmax.f32 %v652, %v758
      %v943 = vmax.f32 %v617, %v760
      %v944 = vmax.f32 %v653, %v762
      %v945 = vmax.f32 %v654, %v764
      %v946 = vmax.f32 %v655, %v766
      %v947 = vmax.f32 %v618, %v768
      %v948 = vmax.f32 %v656, %v770
      %v949 = vmax.f32 %v657, %v772
      %v950 = vmax.f32 %v658, %v774
      %v951 = vmax.f32 %v619, %v776
      %v952 = vmax.f32 %v659, %v778
      %v953 = vmax.f32 %v660, %v780
      %v954 = vmax.f32 %v661, %v782
      %v955 = vmax.f32 %v620, %v784
      %v956 = vmax.f32 %v662, %v786
      %v957 = vmax.f32 %v663, %v788
      %v958 = vmax.f32 %v664, %v790
      %v959 = vmax.f32 %v621, %v792
      %v960 = vmax.f32 %v665, %v794
      %v961 = vmax.f32 %v666, %v796
      %v962 = vmax.f32 %v667, %v798
      %v963 = vmax.f32 %v622, %v800
      %v964 = vmax.f32 %v668, %v802
      %v965 = vmax.f32 %v669, %v804
      %v966 = vmax.f32 %v670, %v806
      %v967 = vmax.f32 %v623, %v808
      %v968 = vmax.f32 %v671, %v810
      %v969 = vmax.f32 %v672, %v812
      %v970 = vmax.f32 %v673, %v814
      %v971 = vmax.f32 %v624, %v816
      %v972 = vmax.f32 %v674, %v818
      %v973 = vmax.f32 %v675, %v820
      %v974 = vmax.f32 %v676, %v822
      %v975 = vmax.f32 %v625, %v824
      %v976 = vmax.f32 %v677, %v826
      %v977 = vmax.f32 %v678, %v828
      %v978 = vmax.f32 %v679, %v830
      %v979 = vmax.f32 %v626, %v832
      %v980 = vmax.f32 %v680, %v834
      %v981 = vmax.f32 %v681, %v836
      %v982 = vmax.f32 %v682, %v838
      %v983 = vmax.f32 %v627, %v840
      %v984 = vmax.f32 %v683, %v842
      %v985 = vmax.f32 %v684, %v844
      %v986 = vmax.f32 %v685, %v846
      %v987 = vmax.f32 %v628, %v848
      %v988 = vmax.f32 %v686, %v850
      %v989 = vmax.f32 %v687, %v852
      %v990 = vmax.f32 %v688, %v854
      %v991 = vmax.f32 %v629, %v856
      %v992 = vmax.f32 %v689, %v858
      %v993 = vmax.f32 %v690, %v860
      %v994 = vmax.f32 %v691, %v862
      %v995 = vmax.f32 %v630, %v864
      %v996 = vmax.f32 %v692, %v866
      %v997 = vmax.f32 %v693, %v868
      %v998 = vmax.f32 %v694, %v870
      %v1055 = vperm.slane %v935, 0
      %v1056 = vperm.slane %v936, 0
      %v1057 = vperm.slane %v937, 0
      %v1058 = vperm.slane %v938, 0
      %v1059 = vperm.slane %v939, 0
      %v1060 = vperm.slane %v940, 0
      %v1061 = vperm.slane %v941, 0
      %v1062 = vperm.slane %v942, 0
      %v1063 = vperm.slane %v943, 0
      %v1064 = vperm.slane %v944, 0
      %v1065 = vperm.slane %v945, 0
      %v1066 = vperm.slane %v946, 0
      %v1067 = vperm.slane %v947, 0
      %v1068 = vperm.slane %v948, 0
      %v1069 = vperm.slane %v949, 0
      %v1070 = vperm.slane %v950, 0
      %v1071 = vperm.slane %v951, 0
      %v1072 = vperm.slane %v952, 0
      %v1073 = vperm.slane %v953, 0
      %v1074 = vperm.slane %v954, 0
      %v1075 = vperm.slane %v955, 0
      %v1076 = vperm.slane %v956, 0
      %v1077 = vperm.slane %v957, 0
      %v1078 = vperm.slane %v958, 0
      %v1079 = vperm.slane %v959, 0
      %v1080 = vperm.slane %v960, 0
      %v1081 = vperm.slane %v961, 0
      %v1082 = vperm.slane %v962, 0
      %v1083 = vperm.slane %v963, 0
      %v1084 = vperm.slane %v964, 0
      %v1085 = vperm.slane %v965, 0
      %v1086 = vperm.slane %v966, 0
      %v1087 = vperm.slane %v967, 0
      %v1088 = vperm.slane %v968, 0
      %v1089 = vperm.slane %v969, 0
      %v1090 = vperm.slane %v970, 0
      %v1091 = vperm.slane %v971, 0
      %v1092 = vperm.slane %v972, 0
      %v1093 = vperm.slane %v973, 0
      %v1094 = vperm.slane %v974, 0
      %v1095 = vperm.slane %v975, 0
      %v1096 = vperm.slane %v976, 0
      %v1097 = vperm.slane %v977, 0
      %v1098 = vperm.slane %v978, 0
      %v1099 = vperm.slane %v979, 0
      %v1100 = vperm.slane %v980, 0
      %v1101 = vperm.slane %v981, 0
      %v1102 = vperm.slane %v982, 0
      %v1103 = vperm.slane %v983, 0
      %v1104 = vperm.slane %v984, 0
      %v1105 = vperm.slane %v985, 0
      %v1106 = vperm.slane %v986, 0
      %v1107 = vperm.slane %v987, 0
      %v1108 = vperm.slane %v988, 0
      %v1109 = vperm.slane %v989, 0
      %v1110 = vperm.slane %v990, 0
      %vm1111 = vcmask 1041409
      %v1112 = vsel %vm1111, %v1056, %v1055
      %vm1113 = vcmask 1042434
      %v1114 = vsel %vm1113, %v1057, %v1112
      %vm1115 = vcmask 1043459
      %v1116 = vsel %vm1115, %v1058, %v1114
      %vm1117 = vcmask 1044484
      %v1118 = vsel %vm1117, %v1059, %v1116
      %vm1119 = vcmask 1045509
      %v1120 = vsel %vm1119, %v1060, %v1118
      %vm1121 = vcmask 1046534
      %v1122 = vsel %vm1121, %v1061, %v1120
      %vm1123 = vcmask 1047559
      %v1124 = vsel %vm1123, %v1062, %v1122
      %v1125 = vsel %vm1111, %v1064, %v1063
      %v1126 = vsel %vm1113, %v1065, %v1125
      %v1127 = vsel %vm1115, %v1066, %v1126
      %v1128 = vsel %vm1117, %v1067, %v1127
      %v1129 = vsel %vm1119, %v1068, %v1128
      %v1130 = vsel %vm1121, %v1069, %v1129
      %v1131 = vsel %vm1123, %v1070, %v1130
      %v1132 = vsel %vm1111, %v1072, %v1071
      %v1133 = vsel %vm1113, %v1073, %v1132
      %v1134 = vsel %vm1115, %v1074, %v1133
      %v1135 = vsel %vm1117, %v1075, %v1134
      %v1136 = vsel %vm1119, %v1076, %v1135
      %v1137 = vsel %vm1121, %v1077, %v1136
      %v1138 = vsel %vm1123, %v1078, %v1137
      %v1139 = vsel %vm1111, %v1080, %v1079
      %v1140 = vsel %vm1113, %v1081, %v1139
      %v1141 = vsel %vm1115, %v1082, %v1140
      %v1142 = vsel %vm1117, %v1083, %v1141
      %v1143 = vsel %vm1119, %v1084, %v1142
      %v1144 = vsel %vm1121, %v1085, %v1143
      %v1145 = vsel %vm1123, %v1086, %v1144
      %v1146 = vsel %vm1111, %v1088, %v1087
      %v1147 = vsel %vm1113, %v1089, %v1146
      %v1148 = vsel %vm1115, %v1090, %v1147
      %v1149 = vsel %vm1117, %v1091, %v1148
      %v1150 = vsel %vm1119, %v1092, %v1149
      %v1151 = vsel %vm1121, %v1093, %v1150
      %v1152 = vsel %vm1123, %v1094, %v1151
      %v1153 = vsel %vm1111, %v1096, %v1095
      %v1154 = vsel %vm1113, %v1097, %v1153
      %v1155 = vsel %vm1115, %v1098, %v1154
      %v1156 = vsel %vm1117, %v1099, %v1155
      %v1157 = vsel %vm1119, %v1100, %v1156
      %v1158 = vsel %vm1121, %v1101, %v1157
      %v1159 = vsel %vm1123, %v1102, %v1158
      %v1160 = vsel %vm1111, %v1104, %v1103
      %v1161 = vsel %vm1113, %v1105, %v1160
      %v1162 = vsel %vm1115, %v1106, %v1161
      %v1163 = vsel %vm1117, %v1107, %v1162
      %v1164 = vsel %vm1119, %v1108, %v1163
      %v1165 = vsel %vm1121, %v1109, %v1164
      %v1166 = vsel %vm1123, %v1110, %v1165
      %v1168 = vrot.slane 0.0, 7
      %v1169 = vrot.slane %v1124, 7
      %v1170 = vrot.slane %v1131, 7
      %v1171 = vrot.slane %v1138, 7
      %v1172 = vrot.slane %v1145, 7
      %v1173 = vrot.slane %v1152, 7
      %v1174 = vrot.slane %v1159, 7
      %v1175 = vrot.slane %v1166, 7
      %vm1184 = vcmask 1040384
      %v1185 = vsel %vm1184, 0.0, %v1168
      %v1186 = vsel %vm1184, 0.0, %v1169
      %v1187 = vsel %vm1184, 0.0, %v1170
      %v1188 = vsel %vm1184, 0.0, %v1171
      %v1189 = vsel %vm1184, 0.0, %v1172
      %v1190 = vsel %vm1184, 0.0, %v1173
      %v1191 = vsel %vm1184, 0.0, %v1174
      %v1192 = vsel %vm1184, 0.0, %v1175
      %v1193 = vld [vmem:[%s3] sm:$0xff]
      %v1194 = vld [vmem:[%s3 + $0x8] sm:$0xff]
      %v1195 = vld [vmem:[%s3 + $0x10] sm:$0xff]
      %v1196 = vld [vmem:[%s3 + $0x18] sm:$0xff]
      %s1197 = scalar_lea.vmem %s3, 32
      %v1198 = vld [vmem:[%s1197] sm:$0xff]
      %v1199 = vld [vmem:[%s1197 + $0x8] sm:$0xff]
      %v1200 = vld [vmem:[%s1197 + $0x10] sm:$0xff]
      %v1201 = vld [vmem:[%s1197 + $0x18] sm:$0xff]
      %v1202 = vsel %vm373, 0.0, 0
      %v1204 = vsel %vm373, %v1124, 0
      %v1206 = vsel %vm373, %v1131, 0
      %v1208 = vsel %vm373, %v1138, 0
      %v1210 = vsel %vm373, %v1145, 0
      %v1212 = vsel %vm373, %v1152, 0
      %v1214 = vsel %vm373, %v1159, 0
      %v1216 = vsel %vm373, %v1166, 0
      %1218 = vmatpush.msra.mxu0 0.0
      %1219 = vmatpush.msra.mxu0 0.0
      %1220 = vmatpush.msra.mxu0 0.0
      %1221 = vmatpush.msra.mxu0 0.0
      %1222 = vmatpush.msra.mxu0 0.0
      %1223 = vmatpush.msra.mxu0 0.0
      %1224 = vmatpush.msra.mxu0 0.0
      %1225 = vmatpush.msra.mxu0 0.0
      %1226 = vmatpush.msra.mxu0 0.0
      %1227 = vmatpush.msra.mxu0 0.0
      %1228 = vmatpush.msra.mxu0 0.0
      %1229 = vmatpush.msra.mxu0 0.0
      %1230 = vmatpush.msra.mxu0 %v1201
      %1231 = vmatpush.msra.mxu0 %v1200
      %1232 = vmatpush.msra.mxu0 %v1199
      %1233 = vmatpush.msra.mxu0 %v1198
      %1234 = vmatmul.f32.gmra.mxu0 %v1202
      %v1235 = vpop.f32.mrf.mxu0
      %v1236 = vadd.f32 0.0, %v1235
      %1237 = vmatmul.f32.gmra.mxu0 %v1204
      %v1238 = vpop.f32.mrf.mxu0
      %v1239 = vadd.f32 0.0, %v1238
      %1240 = vmatmul.f32.gmra.mxu0 %v1206
      %v1241 = vpop.f32.mrf.mxu0
      %v1242 = vadd.f32 0.0, %v1241
      %1243 = vmatmul.f32.gmra.mxu0 %v1208
      %v1244 = vpop.f32.mrf.mxu0
      %v1245 = vadd.f32 0.0, %v1244
      %1246 = vmatmul.f32.gmra.mxu0 %v1210
      %v1247 = vpop.f32.mrf.mxu0
      %v1248 = vadd.f32 0.0, %v1247
      %1249 = vmatmul.f32.gmra.mxu0 %v1212
      %v1250 = vpop.f32.mrf.mxu0
      %v1251 = vadd.f32 0.0, %v1250
      %1252 = vmatmul.f32.gmra.mxu0 %v1214
      %v1253 = vpop.f32.mrf.mxu0
      %v1254 = vadd.f32 0.0, %v1253
      %1255 = vmatmul.f32.gmra.mxu0 %v1216
      %v1256 = vpop.f32.mrf.mxu0
      %v1257 = vadd.f32 0.0, %v1256
      %1258 = vdwg.mxu0
      %v1260 = vsel %vm373, %v1185, 0
      %v1263 = vsel %vm373, %v1186, 0
      %v1266 = vsel %vm373, %v1187, 0
      %v1269 = vsel %vm373, %v1188, 0
      %v1272 = vsel %vm373, %v1189, 0
      %v1275 = vsel %vm373, %v1190, 0
      %v1278 = vsel %vm373, %v1191, 0
      %v1281 = vsel %vm373, %v1192, 0
      %1283 = vmatpush.msra.mxu0 0.0
      %1284 = vmatpush.msra.mxu0 0.0
      %1285 = vmatpush.msra.mxu0 0.0
      %1286 = vmatpush.msra.mxu0 0.0
      %1287 = vmatpush.msra.mxu0 0.0
      %1288 = vmatpush.msra.mxu0 0.0
      %1289 = vmatpush.msra.mxu0 0.0
      %1290 = vmatpush.msra.mxu0 0.0
      %1291 = vmatpush.msra.mxu0 0.0
      %1292 = vmatpush.msra.mxu0 0.0
      %1293 = vmatpush.msra.mxu0 0.0
      %1294 = vmatpush.msra.mxu0 0.0
      %1295 = vmatpush.msra.mxu0 %v1196
      %1296 = vmatpush.msra.mxu0 %v1195
      %1297 = vmatpush.msra.mxu0 %v1194
      %1298 = vmatpush.msra.mxu0 %v1193
      %1299 = vmatmul.f32.gmra.mxu0 %v1260
      %v1300 = vpop.f32.mrf.mxu0
      %v1301 = vadd.f32 %v1236, %v1300
      %1302 = vmatmul.f32.gmra.mxu0 %v1263
      %v1303 = vpop.f32.mrf.mxu0
      %v1304 = vadd.f32 %v1239, %v1303
      %1305 = vmatmul.f32.gmra.mxu0 %v1266
      %v1306 = vpop.f32.mrf.mxu0
      %v1307 = vadd.f32 %v1242, %v1306
      %1308 = vmatmul.f32.gmra.mxu0 %v1269
      %v1309 = vpop.f32.mrf.mxu0
      %v1310 = vadd.f32 %v1245, %v1309
      %1311 = vmatmul.f32.gmra.mxu0 %v1272
      %v1312 = vpop.f32.mrf.mxu0
      %v1313 = vadd.f32 %v1248, %v1312
      %1314 = vmatmul.f32.gmra.mxu0 %v1275
      %v1315 = vpop.f32.mrf.mxu0
      %v1316 = vadd.f32 %v1251, %v1315
      %1317 = vmatmul.f32.gmra.mxu0 %v1278
      %v1318 = vpop.f32.mrf.mxu0
      %v1319 = vadd.f32 %v1254, %v1318
      %1320 = vmatmul.f32.gmra.mxu0 %v1281
      %v1321 = vpop.f32.mrf.mxu0
      %v1322 = vadd.f32 %v1257, %v1321
      %1323 = vdwg.mxu0
      %v1324 = vrot.slane 0.0, 1
      %v1325 = vrot.slane %v1124, 1
      %v1326 = vrot.slane %v1131, 1
      %v1327 = vrot.slane %v1138, 1
      %v1328 = vrot.slane %v1145, 1
      %v1329 = vrot.slane %v1152, 1
      %v1330 = vrot.slane %v1159, 1
      %v1331 = vrot.slane %v1166, 1
      %vm1340 = vcmask 1046528
      %v1341 = vsel %vm1340, %v1324, 0.0
      %v1342 = vsel %vm1340, %v1325, 0.0
      %v1343 = vsel %vm1340, %v1326, 0.0
      %v1344 = vsel %vm1340, %v1327, 0.0
      %v1345 = vsel %vm1340, %v1328, 0.0
      %v1346 = vsel %vm1340, %v1329, 0.0
      %v1347 = vsel %vm1340, %v1330, 0.0
      %v1348 = vsel %vm1340, %v1331, 0.0
      %s1349 = scalar_lea.vmem %s3, 64
      %v1350 = vld [vmem:[%s1349] sm:$0xff]
      %v1351 = vld [vmem:[%s1349 + $0x8] sm:$0xff]
      %v1352 = vld [vmem:[%s1349 + $0x10] sm:$0xff]
      %v1353 = vld [vmem:[%s1349 + $0x18] sm:$0xff]
      %v1355 = vsel %vm373, %v1341, 0
      %v1358 = vsel %vm373, %v1342, 0
      %v1361 = vsel %vm373, %v1343, 0
      %v1364 = vsel %vm373, %v1344, 0
      %v1367 = vsel %vm373, %v1345, 0
      %v1370 = vsel %vm373, %v1346, 0
      %v1373 = vsel %vm373, %v1347, 0
      %v1376 = vsel %vm373, %v1348, 0
      %1378 = vmatpush.msra.mxu0 0.0
      %1379 = vmatpush.msra.mxu0 0.0
      %1380 = vmatpush.msra.mxu0 0.0
      %1381 = vmatpush.msra.mxu0 0.0
      %1382 = vmatpush.msra.mxu0 0.0
      %1383 = vmatpush.msra.mxu0 0.0
      %1384 = vmatpush.msra.mxu0 0.0
      %1385 = vmatpush.msra.mxu0 0.0
      %1386 = vmatpush.msra.mxu0 0.0
      %1387 = vmatpush.msra.mxu0 0.0
      %1388 = vmatpush.msra.mxu0 0.0
      %1389 = vmatpush.msra.mxu0 0.0
      %1390 = vmatpush.msra.mxu0 %v1353
      %1391 = vmatpush.msra.mxu0 %v1352
      %1392 = vmatpush.msra.mxu0 %v1351
      %1393 = vmatpush.msra.mxu0 %v1350
      %1394 = vmatmul.f32.gmra.mxu0 %v1355
      %v1395 = vpop.f32.mrf.mxu0
      %v1396 = vadd.f32 0.0, %v1395
      %1397 = vmatmul.f32.gmra.mxu0 %v1358
      %v1398 = vpop.f32.mrf.mxu0
      %v1399 = vadd.f32 0.0, %v1398
      %1400 = vmatmul.f32.gmra.mxu0 %v1361
      %v1401 = vpop.f32.mrf.mxu0
      %v1402 = vadd.f32 0.0, %v1401
      %1403 = vmatmul.f32.gmra.mxu0 %v1364
      %v1404 = vpop.f32.mrf.mxu0
      %v1405 = vadd.f32 0.0, %v1404
      %1406 = vmatmul.f32.gmra.mxu0 %v1367
      %v1407 = vpop.f32.mrf.mxu0
      %v1408 = vadd.f32 0.0, %v1407
      %1409 = vmatmul.f32.gmra.mxu0 %v1370
      %v1410 = vpop.f32.mrf.mxu0
      %v1411 = vadd.f32 0.0, %v1410
      %1412 = vmatmul.f32.gmra.mxu0 %v1373
      %v1413 = vpop.f32.mrf.mxu0
      %v1414 = vadd.f32 0.0, %v1413
      %1415 = vmatmul.f32.gmra.mxu0 %v1376
      %v1416 = vpop.f32.mrf.mxu0
      %v1417 = vadd.f32 0.0, %v1416
      %1418 = vdwg.mxu0
      %v1419 = vadd.f32 %v1301, %v1396
      %v1420 = vadd.f32 %v1304, %v1399
      %v1421 = vadd.f32 %v1307, %v1402
      %v1422 = vadd.f32 %v1310, %v1405
      %v1423 = vadd.f32 %v1313, %v1408
      %v1424 = vadd.f32 %v1316, %v1411
      %v1425 = vadd.f32 %v1319, %v1414
      %v1426 = vadd.f32 %v1322, %v1417
      %v1434 = vperm.slane %v991, 0
      %v1435 = vperm.slane %v992, 0
      %v1436 = vperm.slane %v993, 0
      %v1437 = vperm.slane %v994, 0
      %v1438 = vperm.slane %v995, 0
      %v1439 = vperm.slane %v996, 0
      %v1440 = vperm.slane %v997, 0
      %v1441 = vsel %vm1113, %v1056, %v1055
      %v1442 = vsel %vm1115, %v1057, %v1441
      %v1443 = vsel %vm1117, %v1058, %v1442
      %v1444 = vsel %vm1119, %v1059, %v1443
      %v1445 = vsel %vm1121, %v1060, %v1444
      %v1446 = vsel %vm1123, %v1061, %v1445
      %v1447 = vsel %vm1113, %v1064, %v1063
      %v1448 = vsel %vm1115, %v1065, %v1447
      %v1449 = vsel %vm1117, %v1066, %v1448
      %v1450 = vsel %vm1119, %v1067, %v1449
      %v1451 = vsel %vm1121, %v1068, %v1450
      %v1452 = vsel %vm1123, %v1069, %v1451
      %v1453 = vsel %vm1113, %v1072, %v1071
      %v1454 = vsel %vm1115, %v1073, %v1453
      %v1455 = vsel %vm1117, %v1074, %v1454
      %v1456 = vsel %vm1119, %v1075, %v1455
      %v1457 = vsel %vm1121, %v1076, %v1456
      %v1458 = vsel %vm1123, %v1077, %v1457
      %v1459 = vsel %vm1113, %v1080, %v1079
      %v1460 = vsel %vm1115, %v1081, %v1459
      %v1461 = vsel %vm1117, %v1082, %v1460
      %v1462 = vsel %vm1119, %v1083, %v1461
      %v1463 = vsel %vm1121, %v1084, %v1462
      %v1464 = vsel %vm1123, %v1085, %v1463
      %v1465 = vsel %vm1113, %v1088, %v1087
      %v1466 = vsel %vm1115, %v1089, %v1465
      %v1467 = vsel %vm1117, %v1090, %v1466
      %v1468 = vsel %vm1119, %v1091, %v1467
      %v1469 = vsel %vm1121, %v1092, %v1468
      %v1470 = vsel %vm1123, %v1093, %v1469
      %v1471 = vsel %vm1113, %v1096, %v1095
      %v1472 = vsel %vm1115, %v1097, %v1471
      %v1473 = vsel %vm1117, %v1098, %v1472
      %v1474 = vsel %vm1119, %v1099, %v1473
      %v1475 = vsel %vm1121, %v1100, %v1474
      %v1476 = vsel %vm1123, %v1101, %v1475
      %v1477 = vsel %vm1113, %v1104, %v1103
      %v1478 = vsel %vm1115, %v1105, %v1477
      %v1479 = vsel %vm1117, %v1106, %v1478
      %v1480 = vsel %vm1119, %v1107, %v1479
      %v1481 = vsel %vm1121, %v1108, %v1480
      %v1482 = vsel %vm1123, %v1109, %v1481
      %v1483 = vsel %vm1113, %v1435, %v1434
      %v1484 = vsel %vm1115, %v1436, %v1483
      %v1485 = vsel %vm1117, %v1437, %v1484
      %v1486 = vsel %vm1119, %v1438, %v1485
      %v1487 = vsel %vm1121, %v1439, %v1486
      %v1488 = vsel %vm1123, %v1440, %v1487
      %v1497 = vsel %vm1184, 0.0, %v1446
      %v1498 = vsel %vm1184, 0.0, %v1452
      %v1499 = vsel %vm1184, 0.0, %v1458
      %v1500 = vsel %vm1184, 0.0, %v1464
      %v1501 = vsel %vm1184, 0.0, %v1470
      %v1502 = vsel %vm1184, 0.0, %v1476
      %v1503 = vsel %vm1184, 0.0, %v1482
      %v1504 = vsel %vm1184, 0.0, %v1488
      %s1505 = scalar_lea.vmem %s3, 96
      %v1506 = vld [vmem:[%s1505] sm:$0xff]
      %v1507 = vld [vmem:[%s1505 + $0x8] sm:$0xff]
      %v1508 = vld [vmem:[%s1505 + $0x10] sm:$0xff]
      %v1509 = vld [vmem:[%s1505 + $0x18] sm:$0xff]
      %v1511 = vsel %vm373, %v1497, 0
      %v1514 = vsel %vm373, %v1498, 0
      %v1517 = vsel %vm373, %v1499, 0
      %v1520 = vsel %vm373, %v1500, 0
      %v1523 = vsel %vm373, %v1501, 0
      %v1526 = vsel %vm373, %v1502, 0
      %v1529 = vsel %vm373, %v1503, 0
      %v1532 = vsel %vm373, %v1504, 0
      %1534 = vmatpush.msra.mxu0 0.0
      %1535 = vmatpush.msra.mxu0 0.0
      %1536 = vmatpush.msra.mxu0 0.0
      %1537 = vmatpush.msra.mxu0 0.0
      %1538 = vmatpush.msra.mxu0 0.0
      %1539 = vmatpush.msra.mxu0 0.0
      %1540 = vmatpush.msra.mxu0 0.0
      %1541 = vmatpush.msra.mxu0 0.0
      %1542 = vmatpush.msra.mxu0 0.0
      %1543 = vmatpush.msra.mxu0 0.0
      %1544 = vmatpush.msra.mxu0 0.0
      %1545 = vmatpush.msra.mxu0 0.0
      %1546 = vmatpush.msra.mxu0 %v1509
      %1547 = vmatpush.msra.mxu0 %v1508
      %1548 = vmatpush.msra.mxu0 %v1507
      %1549 = vmatpush.msra.mxu0 %v1506
      %1550 = vmatmul.f32.gmra.mxu0 %v1511
      %v1551 = vpop.f32.mrf.mxu0
      %v1552 = vadd.f32 0.0, %v1551
      %1553 = vmatmul.f32.gmra.mxu0 %v1514
      %v1554 = vpop.f32.mrf.mxu0
      %v1555 = vadd.f32 0.0, %v1554
      %1556 = vmatmul.f32.gmra.mxu0 %v1517
      %v1557 = vpop.f32.mrf.mxu0
      %v1558 = vadd.f32 0.0, %v1557
      %1559 = vmatmul.f32.gmra.mxu0 %v1520
      %v1560 = vpop.f32.mrf.mxu0
      %v1561 = vadd.f32 0.0, %v1560
      %1562 = vmatmul.f32.gmra.mxu0 %v1523
      %v1563 = vpop.f32.mrf.mxu0
      %v1564 = vadd.f32 0.0, %v1563
      %1565 = vmatmul.f32.gmra.mxu0 %v1526
      %v1566 = vpop.f32.mrf.mxu0
      %v1567 = vadd.f32 0.0, %v1566
      %1568 = vmatmul.f32.gmra.mxu0 %v1529
      %v1569 = vpop.f32.mrf.mxu0
      %v1570 = vadd.f32 0.0, %v1569
      %1571 = vmatmul.f32.gmra.mxu0 %v1532
      %v1572 = vpop.f32.mrf.mxu0
      %v1573 = vadd.f32 0.0, %v1572
      %1574 = vdwg.mxu0
      %v1575 = vadd.f32 %v1419, %v1552
      %v1576 = vadd.f32 %v1420, %v1555
      %v1577 = vadd.f32 %v1421, %v1558
      %v1578 = vadd.f32 %v1422, %v1561
      %v1579 = vadd.f32 %v1423, %v1564
      %v1580 = vadd.f32 %v1424, %v1567
      %v1581 = vadd.f32 %v1425, %v1570
      %v1582 = vadd.f32 %v1426, %v1573
      %s1583 = scalar_lea.vmem %s3, 128
      %v1584 = vld [vmem:[%s1583] sm:$0xff]
      %v1585 = vld [vmem:[%s1583 + $0x8] sm:$0xff]
      %v1586 = vld [vmem:[%s1583 + $0x10] sm:$0xff]
      %v1587 = vld [vmem:[%s1583 + $0x18] sm:$0xff]
      %v1589 = vperm.slane %v998, 0
      %v1590 = vsel %vm1111, %v1435, %v1434
      %v1591 = vsel %vm1113, %v1436, %v1590
      %v1592 = vsel %vm1115, %v1437, %v1591
      %v1593 = vsel %vm1117, %v1438, %v1592
      %v1594 = vsel %vm1119, %v1439, %v1593
      %v1595 = vsel %vm1121, %v1440, %v1594
      %v1596 = vsel %vm1123, %v1589, %v1595
      %v1597 = vsel %vm373, %v1596, 0
      %1599 = vmatpush.msra.mxu0 0.0
      %1600 = vmatpush.msra.mxu0 0.0
      %1601 = vmatpush.msra.mxu0 0.0
      %1602 = vmatpush.msra.mxu0 0.0
      %1603 = vmatpush.msra.mxu0 0.0
      %1604 = vmatpush.msra.mxu0 0.0
      %1605 = vmatpush.msra.mxu0 0.0
      %1606 = vmatpush.msra.mxu0 0.0
      %1607 = vmatpush.msra.mxu0 0.0
      %1608 = vmatpush.msra.mxu0 0.0
      %1609 = vmatpush.msra.mxu0 0.0
      %1610 = vmatpush.msra.mxu0 0.0
      %1611 = vmatpush.msra.mxu0 %v1587
      %1612 = vmatpush.msra.mxu0 %v1586
      %1613 = vmatpush.msra.mxu0 %v1585
      %1614 = vmatpush.msra.mxu0 %v1584
      %1615 = vmatmul.f32.gmra.mxu0 %v1204
      %v1616 = vpop.f32.mrf.mxu0
      %v1617 = vadd.f32 0.0, %v1616
      %1618 = vmatmul.f32.gmra.mxu0 %v1206
      %v1619 = vpop.f32.mrf.mxu0
      %v1620 = vadd.f32 0.0, %v1619
      %1621 = vmatmul.f32.gmra.mxu0 %v1208
      %v1622 = vpop.f32.mrf.mxu0
      %v1623 = vadd.f32 0.0, %v1622
      %1624 = vmatmul.f32.gmra.mxu0 %v1210
      %v1625 = vpop.f32.mrf.mxu0
      %v1626 = vadd.f32 0.0, %v1625
      %1627 = vmatmul.f32.gmra.mxu0 %v1212
      %v1628 = vpop.f32.mrf.mxu0
      %v1629 = vadd.f32 0.0, %v1628
      %1630 = vmatmul.f32.gmra.mxu0 %v1214
      %v1631 = vpop.f32.mrf.mxu0
      %v1632 = vadd.f32 0.0, %v1631
      %1633 = vmatmul.f32.gmra.mxu0 %v1216
      %v1634 = vpop.f32.mrf.mxu0
      %v1635 = vadd.f32 0.0, %v1634
      %1636 = vmatmul.f32.gmra.mxu0 %v1597
      %v1637 = vpop.f32.mrf.mxu0
      %v1638 = vadd.f32 0.0, %v1637
      %1639 = vdwg.mxu0
      %v1640 = vadd.f32 %v1575, %v1617
      %v1641 = vadd.f32 %v1576, %v1620
      %v1642 = vadd.f32 %v1577, %v1623
      %v1643 = vadd.f32 %v1578, %v1626
      %v1644 = vadd.f32 %v1579, %v1629
      %v1645 = vadd.f32 %v1580, %v1632
      %v1646 = vadd.f32 %v1581, %v1635
      %v1647 = vadd.f32 %v1582, %v1638
      %v1648 = vsel %vm1111, %v1057, %v1056
      %v1649 = vsel %vm1113, %v1058, %v1648
      %v1650 = vsel %vm1115, %v1059, %v1649
      %v1651 = vsel %vm1117, %v1060, %v1650
      %v1652 = vsel %vm1119, %v1061, %v1651
      %v1653 = vsel %vm1121, %v1062, %v1652
      %v1654 = vsel %vm1111, %v1065, %v1064
      %v1655 = vsel %vm1113, %v1066, %v1654
      %v1656 = vsel %vm1115, %v1067, %v1655
      %v1657 = vsel %vm1117, %v1068, %v1656
      %v1658 = vsel %vm1119, %v1069, %v1657
      %v1659 = vsel %vm1121, %v1070, %v1658
      %v1660 = vsel %vm1111, %v1073, %v1072
      %v1661 = vsel %vm1113, %v1074, %v1660
      %v1662 = vsel %vm1115, %v1075, %v1661
      %v1663 = vsel %vm1117, %v1076, %v1662
      %v1664 = vsel %vm1119, %v1077, %v1663
      %v1665 = vsel %vm1121, %v1078, %v1664
      %v1666 = vsel %vm1111, %v1081, %v1080
      %v1667 = vsel %vm1113, %v1082, %v1666
      %v1668 = vsel %vm1115, %v1083, %v1667
      %v1669 = vsel %vm1117, %v1084, %v1668
      %v1670 = vsel %vm1119, %v1085, %v1669
      %v1671 = vsel %vm1121, %v1086, %v1670
      %v1672 = vsel %vm1111, %v1089, %v1088
      %v1673 = vsel %vm1113, %v1090, %v1672
      %v1674 = vsel %vm1115, %v1091, %v1673
      %v1675 = vsel %vm1117, %v1092, %v1674
      %v1676 = vsel %vm1119, %v1093, %v1675
      %v1677 = vsel %vm1121, %v1094, %v1676
      %v1678 = vsel %vm1111, %v1097, %v1096
      %v1679 = vsel %vm1113, %v1098, %v1678
      %v1680 = vsel %vm1115, %v1099, %v1679
      %v1681 = vsel %vm1117, %v1100, %v1680
      %v1682 = vsel %vm1119, %v1101, %v1681
      %v1683 = vsel %vm1121, %v1102, %v1682
      %v1684 = vsel %vm1111, %v1105, %v1104
      %v1685 = vsel %vm1113, %v1106, %v1684
      %v1686 = vsel %vm1115, %v1107, %v1685
      %v1687 = vsel %vm1117, %v1108, %v1686
      %v1688 = vsel %vm1119, %v1109, %v1687
      %v1689 = vsel %vm1121, %v1110, %v1688
      %v1690 = vsel %vm1111, %v1436, %v1435
      %v1691 = vsel %vm1113, %v1437, %v1690
      %v1692 = vsel %vm1115, %v1438, %v1691
      %v1693 = vsel %vm1117, %v1439, %v1692
      %v1694 = vsel %vm1119, %v1440, %v1693
      %v1695 = vsel %vm1121, %v1589, %v1694
      %v1704 = vsel %vm1340, %v1653, 0.0
      %v1705 = vsel %vm1340, %v1659, 0.0
      %v1706 = vsel %vm1340, %v1665, 0.0
      %v1707 = vsel %vm1340, %v1671, 0.0
      %v1708 = vsel %vm1340, %v1677, 0.0
      %v1709 = vsel %vm1340, %v1683, 0.0
      %v1710 = vsel %vm1340, %v1689, 0.0
      %v1711 = vsel %vm1340, %v1695, 0.0
      %s1712 = scalar_lea.vmem %s3, 160
      %v1713 = vld [vmem:[%s1712] sm:$0xff]
      %v1714 = vld [vmem:[%s1712 + $0x8] sm:$0xff]
      %v1715 = vld [vmem:[%s1712 + $0x10] sm:$0xff]
      %v1716 = vld [vmem:[%s1712 + $0x18] sm:$0xff]
      %v1718 = vsel %vm373, %v1704, 0
      %v1721 = vsel %vm373, %v1705, 0
      %v1724 = vsel %vm373, %v1706, 0
      %v1727 = vsel %vm373, %v1707, 0
      %v1730 = vsel %vm373, %v1708, 0
      %v1733 = vsel %vm373, %v1709, 0
      %v1736 = vsel %vm373, %v1710, 0
      %v1739 = vsel %vm373, %v1711, 0
      %1741 = vmatpush.msra.mxu0 0.0
      %1742 = vmatpush.msra.mxu0 0.0
      %1743 = vmatpush.msra.mxu0 0.0
      %1744 = vmatpush.msra.mxu0 0.0
      %1745 = vmatpush.msra.mxu0 0.0
      %1746 = vmatpush.msra.mxu0 0.0
      %1747 = vmatpush.msra.mxu0 0.0
      %1748 = vmatpush.msra.mxu0 0.0
      %1749 = vmatpush.msra.mxu0 0.0
      %1750 = vmatpush.msra.mxu0 0.0
      %1751 = vmatpush.msra.mxu0 0.0
      %1752 = vmatpush.msra.mxu0 0.0
      %1753 = vmatpush.msra.mxu0 %v1716
      %1754 = vmatpush.msra.mxu0 %v1715
      %1755 = vmatpush.msra.mxu0 %v1714
      %1756 = vmatpush.msra.mxu0 %v1713
      %1757 = vmatmul.f32.gmra.mxu0 %v1718
      %v1758 = vpop.f32.mrf.mxu0
      %v1759 = vadd.f32 0.0, %v1758
      %1760 = vmatmul.f32.gmra.mxu0 %v1721
      %v1761 = vpop.f32.mrf.mxu0
      %v1762 = vadd.f32 0.0, %v1761
      %1763 = vmatmul.f32.gmra.mxu0 %v1724
      %v1764 = vpop.f32.mrf.mxu0
      %v1765 = vadd.f32 0.0, %v1764
      %1766 = vmatmul.f32.gmra.mxu0 %v1727
      %v1767 = vpop.f32.mrf.mxu0
      %v1768 = vadd.f32 0.0, %v1767
      %1769 = vmatmul.f32.gmra.mxu0 %v1730
      %v1770 = vpop.f32.mrf.mxu0
      %v1771 = vadd.f32 0.0, %v1770
      %1772 = vmatmul.f32.gmra.mxu0 %v1733
      %v1773 = vpop.f32.mrf.mxu0
      %v1774 = vadd.f32 0.0, %v1773
      %1775 = vmatmul.f32.gmra.mxu0 %v1736
      %v1776 = vpop.f32.mrf.mxu0
      %v1777 = vadd.f32 0.0, %v1776
      %1778 = vmatmul.f32.gmra.mxu0 %v1739
      %v1779 = vpop.f32.mrf.mxu0
      %v1780 = vadd.f32 0.0, %v1779
      %1781 = vdwg.mxu0
      %v1782 = vadd.f32 %v1640, %v1759
      %v1783 = vadd.f32 %v1641, %v1762
      %v1784 = vadd.f32 %v1642, %v1765
      %v1785 = vadd.f32 %v1643, %v1768
      %v1786 = vadd.f32 %v1644, %v1771
      %v1787 = vadd.f32 %v1645, %v1774
      %v1788 = vadd.f32 %v1646, %v1777
      %v1789 = vadd.f32 %v1647, %v1780
      %v1790 = vperm.slane 0.0, 0
      %v1791 = vsel %vm1115, %v1790, %v1790
      %v1792 = vsel %vm1117, %v1790, %v1791
      %v1793 = vsel %vm1119, %v1790, %v1792
      %v1794 = vsel %vm1121, %v1790, %v1793
      %v1795 = vsel %vm1123, %v1790, %v1794
      %v1797 = vsel %vm1184, 0.0, %v1795
      %s1798 = scalar_lea.vmem %s3, 192
      %v1799 = vld [vmem:[%s1798] sm:$0xff]
      %v1800 = vld [vmem:[%s1798 + $0x8] sm:$0xff]
      %v1801 = vld [vmem:[%s1798 + $0x10] sm:$0xff]
      %v1802 = vld [vmem:[%s1798 + $0x18] sm:$0xff]
      %v1804 = vsel %vm373, %v1797, 0
      %1806 = vmatpush.msra.mxu0 0.0
      %1807 = vmatpush.msra.mxu0 0.0
      %1808 = vmatpush.msra.mxu0 0.0
      %1809 = vmatpush.msra.mxu0 0.0
      %1810 = vmatpush.msra.mxu0 0.0
      %1811 = vmatpush.msra.mxu0 0.0
      %1812 = vmatpush.msra.mxu0 0.0
      %1813 = vmatpush.msra.mxu0 0.0
      %1814 = vmatpush.msra.mxu0 0.0
      %1815 = vmatpush.msra.mxu0 0.0
      %1816 = vmatpush.msra.mxu0 0.0
      %1817 = vmatpush.msra.mxu0 0.0
      %1818 = vmatpush.msra.mxu0 %v1802
      %1819 = vmatpush.msra.mxu0 %v1801
      %1820 = vmatpush.msra.mxu0 %v1800
      %1821 = vmatpush.msra.mxu0 %v1799
      %1822 = vmatmul.f32.gmra.mxu0 %v1514
      %v1823 = vpop.f32.mrf.mxu0
      %v1824 = vadd.f32 0.0, %v1823
      %1825 = vmatmul.f32.gmra.mxu0 %v1517
      %v1826 = vpop.f32.mrf.mxu0
      %v1827 = vadd.f32 0.0, %v1826
      %1828 = vmatmul.f32.gmra.mxu0 %v1520
      %v1829 = vpop.f32.mrf.mxu0
      %v1830 = vadd.f32 0.0, %v1829
      %1831 = vmatmul.f32.gmra.mxu0 %v1523
      %v1832 = vpop.f32.mrf.mxu0
      %v1833 = vadd.f32 0.0, %v1832
      %1834 = vmatmul.f32.gmra.mxu0 %v1526
      %v1835 = vpop.f32.mrf.mxu0
      %v1836 = vadd.f32 0.0, %v1835
      %1837 = vmatmul.f32.gmra.mxu0 %v1529
      %v1838 = vpop.f32.mrf.mxu0
      %v1839 = vadd.f32 0.0, %v1838
      %1840 = vmatmul.f32.gmra.mxu0 %v1532
      %v1841 = vpop.f32.mrf.mxu0
      %v1842 = vadd.f32 0.0, %v1841
      %1843 = vmatmul.f32.gmra.mxu0 %v1804
      %v1844 = vpop.f32.mrf.mxu0
      %v1845 = vadd.f32 0.0, %v1844
      %1846 = vdwg.mxu0
      %v1847 = vadd.f32 %v1782, %v1824
      %v1848 = vadd.f32 %v1783, %v1827
      %v1849 = vadd.f32 %v1784, %v1830
      %v1850 = vadd.f32 %v1785, %v1833
      %v1851 = vadd.f32 %v1786, %v1836
      %v1852 = vadd.f32 %v1787, %v1839
      %v1853 = vadd.f32 %v1788, %v1842
      %v1854 = vadd.f32 %v1789, %v1845
      %s1855 = scalar_lea.vmem %s3, 224
      %v1856 = vld [vmem:[%s1855] sm:$0xff]
      %v1857 = vld [vmem:[%s1855 + $0x8] sm:$0xff]
      %v1858 = vld [vmem:[%s1855 + $0x10] sm:$0xff]
      %v1859 = vld [vmem:[%s1855 + $0x18] sm:$0xff]
      %v1860 = vsel %vm1113, %v1790, %v1790
      %v1861 = vsel %vm1115, %v1790, %v1860
      %v1862 = vsel %vm1117, %v1790, %v1861
      %v1863 = vsel %vm1119, %v1790, %v1862
      %v1864 = vsel %vm1121, %v1790, %v1863
      %v1865 = vsel %vm1123, %v1790, %v1864
      %v1866 = vsel %vm373, %v1865, 0
      %1868 = vmatpush.msra.mxu0 0.0
      %1869 = vmatpush.msra.mxu0 0.0
      %1870 = vmatpush.msra.mxu0 0.0
      %1871 = vmatpush.msra.mxu0 0.0
      %1872 = vmatpush.msra.mxu0 0.0
      %1873 = vmatpush.msra.mxu0 0.0
      %1874 = vmatpush.msra.mxu0 0.0
      %1875 = vmatpush.msra.mxu0 0.0
      %1876 = vmatpush.msra.mxu0 0.0
      %1877 = vmatpush.msra.mxu0 0.0
      %1878 = vmatpush.msra.mxu0 0.0
      %1879 = vmatpush.msra.mxu0 0.0
      %1880 = vmatpush.msra.mxu0 %v1859
      %1881 = vmatpush.msra.mxu0 %v1858
      %1882 = vmatpush.msra.mxu0 %v1857
      %1883 = vmatpush.msra.mxu0 %v1856
      %1884 = vmatmul.f32.gmra.mxu0 %v1206
      %v1885 = vpop.f32.mrf.mxu0
      %v1886 = vadd.f32 0.0, %v1885
      %1887 = vmatmul.f32.gmra.mxu0 %v1208
      %v1888 = vpop.f32.mrf.mxu0
      %v1889 = vadd.f32 0.0, %v1888
      %1890 = vmatmul.f32.gmra.mxu0 %v1210
      %v1891 = vpop.f32.mrf.mxu0
      %v1892 = vadd.f32 0.0, %v1891
      %1893 = vmatmul.f32.gmra.mxu0 %v1212
      %v1894 = vpop.f32.mrf.mxu0
      %v1895 = vadd.f32 0.0, %v1894
      %1896 = vmatmul.f32.gmra.mxu0 %v1214
      %v1897 = vpop.f32.mrf.mxu0
      %v1898 = vadd.f32 0.0, %v1897
      %1899 = vmatmul.f32.gmra.mxu0 %v1216
      %v1900 = vpop.f32.mrf.mxu0
      %v1901 = vadd.f32 0.0, %v1900
      %1902 = vmatmul.f32.gmra.mxu0 %v1597
      %v1903 = vpop.f32.mrf.mxu0
      %v1904 = vadd.f32 0.0, %v1903
      %1905 = vmatmul.f32.gmra.mxu0 %v1866
      %v1906 = vpop.f32.mrf.mxu0
      %v1907 = vadd.f32 0.0, %v1906
      %1908 = vdwg.mxu0
      %v1909 = vadd.f32 %v1847, %v1886
      %v1910 = vadd.f32 %v1848, %v1889
      %v1911 = vadd.f32 %v1849, %v1892
      %v1912 = vadd.f32 %v1850, %v1895
      %v1913 = vadd.f32 %v1851, %v1898
      %v1914 = vadd.f32 %v1852, %v1901
      %v1915 = vadd.f32 %v1853, %v1904
      %v1916 = vadd.f32 %v1854, %v1907
      %v1918 = vsel %vm1340, %v1864, 0.0
      %s1919 = scalar_lea.vmem %s3, 256
      %v1920 = vld [vmem:[%s1919] sm:$0xff]
      %v1921 = vld [vmem:[%s1919 + $0x8] sm:$0xff]
      %v1922 = vld [vmem:[%s1919 + $0x10] sm:$0xff]
      %v1923 = vld [vmem:[%s1919 + $0x18] sm:$0xff]
      %v1925 = vsel %vm373, %v1918, 0
      %1927 = vmatpush.msra.mxu0 0.0
      %1928 = vmatpush.msra.mxu0 0.0
      %1929 = vmatpush.msra.mxu0 0.0
      %1930 = vmatpush.msra.mxu0 0.0
      %1931 = vmatpush.msra.mxu0 0.0
      %1932 = vmatpush.msra.mxu0 0.0
      %1933 = vmatpush.msra.mxu0 0.0
      %1934 = vmatpush.msra.mxu0 0.0
      %1935 = vmatpush.msra.mxu0 0.0
      %1936 = vmatpush.msra.mxu0 0.0
      %1937 = vmatpush.msra.mxu0 0.0
      %1938 = vmatpush.msra.mxu0 0.0
      %1939 = vmatpush.msra.mxu0 %v1923
      %1940 = vmatpush.msra.mxu0 %v1922
      %1941 = vmatpush.msra.mxu0 %v1921
      %1942 = vmatpush.msra.mxu0 %v1920
      %1943 = vmatmul.f32.gmra.mxu0 %v1721
      %v1944 = vpop.f32.mrf.mxu0
      %v1945 = vadd.f32 0.0, %v1944
      %1946 = vmatmul.f32.gmra.mxu0 %v1724
      %v1947 = vpop.f32.mrf.mxu0
      %v1948 = vadd.f32 0.0, %v1947
      %1949 = vmatmul.f32.gmra.mxu0 %v1727
      %v1950 = vpop.f32.mrf.mxu0
      %v1951 = vadd.f32 0.0, %v1950
      %1952 = vmatmul.f32.gmra.mxu0 %v1730
      %v1953 = vpop.f32.mrf.mxu0
      %v1954 = vadd.f32 0.0, %v1953
      %1955 = vmatmul.f32.gmra.mxu0 %v1733
      %v1956 = vpop.f32.mrf.mxu0
      %v1957 = vadd.f32 0.0, %v1956
      %1958 = vmatmul.f32.gmra.mxu0 %v1736
      %v1959 = vpop.f32.mrf.mxu0
      %v1960 = vadd.f32 0.0, %v1959
      %1961 = vmatmul.f32.gmra.mxu0 %v1739
      %v1962 = vpop.f32.mrf.mxu0
      %v1963 = vadd.f32 0.0, %v1962
      %1964 = vmatmul.f32.gmra.mxu0 %v1925
      %v1965 = vpop.f32.mrf.mxu0
      %v1966 = vadd.f32 0.0, %v1965
      %1967 = vdwg.mxu0
      %v1968 = vadd.f32 %v1909, %v1945
      %v1969 = vadd.f32 %v1910, %v1948
      %v1970 = vadd.f32 %v1911, %v1951
      %v1971 = vadd.f32 %v1912, %v1954
      %v1972 = vadd.f32 %v1913, %v1957
      %v1973 = vadd.f32 %v1914, %v1960
      %v1974 = vadd.f32 %v1915, %v1963
      %v1975 = vadd.f32 %v1916, %v1966
      %v1976 = vld [vmem:[%s4] sm:$0x1]
      %v1978 = vperm.slane %v1976, 0
      %v1980 = vadd.f32 %v1968, %v1978
      %v1981 = vadd.f32 %v1969, %v1978
      %v1982 = vadd.f32 %v1970, %v1978
      %v1983 = vadd.f32 %v1971, %v1978
      %v1984 = vadd.f32 %v1972, %v1978
      %v1985 = vadd.f32 %v1973, %v1978
      %v1986 = vadd.f32 %v1974, %v1978
      %v1987 = vadd.f32 %v1975, %v1978
      %v1988 = vmax.f32 %v1980, 0.0
      %v1989 = vmax.f32 %v1981, 0.0
      %v1990 = vmax.f32 %v1982, 0.0
      %v1991 = vmax.f32 %v1983, 0.0
      %v1992 = vmax.f32 %v1984, 0.0
      %v1993 = vmax.f32 %v1985, 0.0
      %v1994 = vmax.f32 %v1986, 0.0
      %v1995 = vmax.f32 %v1987, 0.0
      %v1996 = vmax.f32 %v1988, %v1989
      %v1997 = vmax.f32 %v1990, %v1991
      %v1998 = vmax.f32 %v1992, %v1993
      %v1999 = vmax.f32 %v1994, %v1995
      %v2004 = vrot.slane %v1996, 2
      %v2005 = vrot.slane %v1996, 4
      %v2006 = vrot.slane %v1996, 6
      %v2007 = vrot.slane %v1997, 2
      %v2008 = vrot.slane %v1997, 4
      %v2009 = vrot.slane %v1997, 6
      %v2010 = vrot.slane %v1998, 2
      %v2011 = vrot.slane %v1998, 4
      %v2012 = vrot.slane %v1998, 6
      %v2013 = vrot.slane %v1999, 2
      %v2014 = vrot.slane %v1999, 4
      %v2015 = vrot.slane %v1999, 6
      %v2028 = vrot.slane %v1996, 7
      %v2029 = vrot.slane %v2028, 2
      %v2030 = vrot.slane %v2004, 7
      %v2031 = vrot.slane %v2030, 2
      %v2032 = vrot.slane %v2005, 7
      %v2033 = vrot.slane %v2032, 2
      %v2034 = vrot.slane %v2006, 7
      %v2035 = vrot.slane %v2034, 2
      %v2036 = vrot.slane %v1997, 7
      %v2037 = vrot.slane %v2036, 2
      %v2038 = vrot.slane %v2007, 7
      %v2039 = vrot.slane %v2038, 2
      %v2040 = vrot.slane %v2008, 7
      %v2041 = vrot.slane %v2040, 2
      %v2042 = vrot.slane %v2009, 7
      %v2043 = vrot.slane %v2042, 2
      %v2044 = vrot.slane %v1998, 7
      %v2045 = vrot.slane %v2044, 2
      %v2046 = vrot.slane %v2010, 7
      %v2047 = vrot.slane %v2046, 2
      %v2048 = vrot.slane %v2011, 7
      %v2049 = vrot.slane %v2048, 2
      %v2050 = vrot.slane %v2012, 7
      %v2051 = vrot.slane %v2050, 2
      %v2052 = vrot.slane %v1999, 7
      %v2053 = vrot.slane %v2052, 2
      %v2054 = vrot.slane %v2013, 7
      %v2055 = vrot.slane %v2054, 2
      %v2056 = vrot.slane %v2014, 7
      %v2057 = vrot.slane %v2056, 2
      %v2058 = vrot.slane %v2015, 7
      %v2059 = vrot.slane %v2058, 2
      %v2076 = vmax.f32 %v1996, %v2029
      %v2077 = vmax.f32 %v2004, %v2031
      %v2078 = vmax.f32 %v2005, %v2033
      %v2079 = vmax.f32 %v2006, %v2035
      %v2080 = vmax.f32 %v1997, %v2037
      %v2081 = vmax.f32 %v2007, %v2039
      %v2082 = vmax.f32 %v2008, %v2041
      %v2083 = vmax.f32 %v2009, %v2043
      %v2084 = vmax.f32 %v1998, %v2045
      %v2085 = vmax.f32 %v2010, %v2047
      %v2086 = vmax.f32 %v2011, %v2049
      %v2087 = vmax.f32 %v2012, %v2051
      %v2088 = vmax.f32 %v1999, %v2053
      %v2089 = vmax.f32 %v2013, %v2055
      %v2090 = vmax.f32 %v2014, %v2057
      %v2091 = vmax.f32 %v2015, %v2059
      %v2092 = vld [vmem:[%s5] sm:$0xff]
      %v2093 = vld [vmem:[%s5 + $0x8] sm:$0xff]
      %v2094 = vld [vmem:[%s5 + $0x10] sm:$0xff]
      %v2095 = vld [vmem:[%s5 + $0x18] sm:$0xff]
      %v2096 = vld [vmem:[%s5 + $0x20] sm:$0xff]
      %v2097 = vld [vmem:[%s5 + $0x28] sm:$0xff]
      %v2098 = vld [vmem:[%s5 + $0x30] sm:$0xff]
      %v2099 = vld [vmem:[%s5 + $0x38] sm:$0xff]
      %v2100 = vld [vmem:[%s6] sm:$0x1]
      %v2102 = vperm.slane %v2100, 0
      %v2120 = vperm.slane %v2076, 0
      %v2121 = vperm.slane %v2077, 0
      %v2122 = vperm.slane %v2078, 0
      %v2123 = vperm.slane %v2079, 0
      %v2124 = vperm.slane %v2080, 0
      %v2125 = vperm.slane %v2081, 0
      %v2126 = vperm.slane %v2082, 0
      %v2127 = vperm.slane %v2083, 0
      %v2128 = vperm.slane %v2084, 0
      %v2129 = vperm.slane %v2085, 0
      %v2130 = vperm.slane %v2086, 0
      %v2131 = vperm.slane %v2087, 0
      %v2132 = vperm.slane %v2088, 0
      %v2133 = vperm.slane %v2089, 0
      %v2134 = vperm.slane %v2090, 0
      %v2135 = vperm.slane %v2091, 0
      %v2136 = vsel %vm1111, %v2121, %v2120
      %v2137 = vsel %vm1113, %v2122, %v2136
      %v2138 = vsel %vm1115, %v2123, %v2137
      %v2139 = vsel %vm1117, %v2124, %v2138
      %v2140 = vsel %vm1119, %v2125, %v2139
      %v2141 = vsel %vm1121, %v2126, %v2140
      %v2142 = vsel %vm1123, %v2127, %v2141
      %v2143 = vsel %vm1111, %v2129, %v2128
      %v2144 = vsel %vm1113, %v2130, %v2143
      %v2145 = vsel %vm1115, %v2131, %v2144
      %v2146 = vsel %vm1117, %v2132, %v2145
      %v2147 = vsel %vm1119, %v2133, %v2146
      %v2148 = vsel %vm1121, %v2134, %v2147
      %v2149 = vsel %vm1123, %v2135, %v2148
      %vm2150 = vcmask 523264
      %v2151 = vsel %vm2150, %v2142, 0
      %v2153 = vsel %vm2150, %v2149, 0
      %2155 = vmatpush.msra.mxu0 0.0
      %2156 = vmatpush.msra.mxu0 0.0
      %2157 = vmatpush.msra.mxu0 0.0
      %2158 = vmatpush.msra.mxu0 0.0
      %2159 = vmatpush.msra.mxu0 0.0
      %2160 = vmatpush.msra.mxu0 0.0
      %2161 = vmatpush.msra.mxu0 0.0
      %2162 = vmatpush.msra.mxu0 0.0
      %2163 = vmatpush.msra.mxu0 %v2099
      %2164 = vmatpush.msra.mxu0 %v2098
      %2165 = vmatpush.msra.mxu0 %v2097
      %2166 = vmatpush.msra.mxu0 %v2096
      %2167 = vmatpush.msra.mxu0 %v2095
      %2168 = vmatpush.msra.mxu0 %v2094
      %2169 = vmatpush.msra.mxu0 %v2093
      %2170 = vmatpush.msra.mxu0 %v2092
      %2171 = vmatmul.f32.gmra.mxu0 %v2151
      %v2172 = vpop.f32.mrf.mxu0
      %v2173 = vadd.f32 %v2102, %v2172
      %2174 = vmatmul.f32.gmra.mxu0 %v2153
      %v2175 = vpop.f32.mrf.mxu0
      %v2176 = vadd.f32 %v2102, %v2175
      %2177 = vdwg.mxu0
      %v2178 = vmax.f32 %v2173, 0.0
      %v2179 = vmax.f32 %v2176, 0.0
      %v2180 = vld [vmem:[%s7] sm:$0xff]
      %v2181 = vld [vmem:[%s7 + $0x8] sm:$0xff]
      %v2182 = vld [vmem:[%s7 + $0x10] sm:$0xff]
      %v2183 = vld [vmem:[%s7 + $0x18] sm:$0xff]
      %v2184 = vld [vmem:[%s7 + $0x20] sm:$0xff]
      %v2185 = vld [vmem:[%s7 + $0x28] sm:$0xff]
      %v2186 = vld [vmem:[%s7 + $0x30] sm:$0xff]
      %v2187 = vld [vmem:[%s7 + $0x38] sm:$0xff]
      %v2188 = vld [vmem:[%s7 + $0x40] sm:$0xff]
      %v2189 = vld [vmem:[%s7 + $0x48] sm:$0xff]
      %v2190 = vld [vmem:[%s7 + $0x50] sm:$0xff]
      %v2191 = vld [vmem:[%s7 + $0x58] sm:$0xff]
      %v2192 = vld [vmem:[%s7 + $0x60] sm:$0xff]
      %v2193 = vld [vmem:[%s7 + $0x68] sm:$0xff]
      %v2194 = vld [vmem:[%s7 + $0x70] sm:$0xff]
      %v2195 = vld [vmem:[%s7 + $0x78] sm:$0xff]
      %v2196 = vld [vmem:[%s8] sm:$0x1]
      %v2198 = vperm.slane %v2196, 0
      %2200 = vmatpush.msra.mxu0 %v2195
      %2201 = vmatpush.msra.mxu0 %v2194
      %2202 = vmatpush.msra.mxu0 %v2193
      %2203 = vmatpush.msra.mxu0 %v2192
      %2204 = vmatpush.msra.mxu0 %v2191
      %2205 = vmatpush.msra.mxu0 %v2190
      %2206 = vmatpush.msra.mxu0 %v2189
      %2207 = vmatpush.msra.mxu0 %v2188
      %2208 = vmatpush.msra.mxu0 %v2187
      %2209 = vmatpush.msra.mxu0 %v2186
      %2210 = vmatpush.msra.mxu0 %v2185
      %2211 = vmatpush.msra.mxu0 %v2184
      %2212 = vmatpush.msra.mxu0 %v2183
      %2213 = vmatpush.msra.mxu0 %v2182
      %2214 = vmatpush.msra.mxu0 %v2181
      %2215 = vmatpush.msra.mxu0 %v2180
      %2216 = vmatmul.f32.gmra.mxu0 %v2178
      %v2217 = vpop.f32.mrf.mxu0
      %v2218 = vadd.f32 %v2198, %v2217
      %2219 = vmatmul.f32.gmra.mxu0 %v2179
      %v2220 = vpop.f32.mrf.mxu0
      %v2221 = vadd.f32 %v2198, %v2220
      %2222 = vdwg.mxu0
      %2223 = vst.msk [vmem:[%s332] sm:$0xff] %vm373, %v2218
      %2224 = vst.msk [vmem:[%s332 + $0x8] sm:$0xff] %vm373, %v2221
      %p2225 = scmp.lt.s32.totalorder %s20, 1
      %s2226 = scalar_select %p2225, %s20, 1
      %s2227 = smul.addr %s2226, 2
      %s2228 = smul.addr %s2227, 8
      %s2229 = scalar_lea.vmem %s9, %s2228
      // Predicated region
      $region57: #{student_unet_forward.1} parent=55 // pred_check
        %p2230 = pneg %p232
      $region58: #{student_unet_forward.1} parent=55 // pred_check_branch
        %2232 = sbr.rel (%p2230) target = $region60
      $region59: #{student_unet_forward.1} parent=55 // pred_region
        _
      $region60: #{student_unet_forward.1} parent=55 // pred_fallthru
        _
    $region56: #{student_unet_forward.1} parent=5 // pred_fallthru
      _
    %p2233 = scmp.le.s32.totalorder 2, %s15
    // Predicated region
    $region61: #{student_unet_forward.1} parent=5 // pred_check
      %p2234 = pneg %p2233
    $region62: #{student_unet_forward.1} parent=5 // pred_check_branch
      %2236 = sbr.rel (%p2234) target = $region64
    $region63: #{student_unet_forward.1} parent=5 // pred_region
      %s2237 = ssub.s32 %s15, 2
      // Predicated region
      $region65: #{student_unet_forward.1} parent=63 // pred_check
        %p2238 = pneg %p238
      $region66: #{student_unet_forward.1} parent=63 // pred_check_branch
        %2240 = sbr.rel (%p2238) target = $region68
      $region67: #{student_unet_forward.1} parent=63 // pred_region
        %p2241 = scmp.lt.s32.totalorder %s21, 1
        %s2242 = scalar_select %p2241, %s21, 1
        %s2243 = smul.addr %s2242, 2
        %s2244 = smul.addr %s2243, 8
        %s2245 = scalar_lea.vmem %s9, %s2244
      $region68: #{student_unet_forward.1} parent=63 // pred_fallthru
        _
    $region64: #{student_unet_forward.1} parent=5 // pred_fallthru
      _
  $region6: #{student_unet_forward.1} parent=0 // loop_footer
    %s19 = sadd.s32 1, %s15
  $region7: #{student_unet_forward.1} parent=0 // loop_footer_branch
    %14 = sbr.rel target = $region3
  $region8: #{student_unet_forward.1} parent=0 // loop_exit
    _

</llo_original>
